<compile_context>
chip_gen: v6e
topology: v6e:2x2x1
jax: 0.10.0
libtpu: 0.0.40
codegen_flags: <defaults>
</compile_context>

<pallas_src>
import functools

import jax
import jax.numpy as jnp
from jax.experimental import pallas as pl
from jax.experimental.pallas import tpu as pltpu


def _round_up(x, m):
    return ((x + m - 1) // m) * m


def _vmem_limit_bytes():
    """~85% of physical VMEM, leaving headroom for Mosaic internal scratch."""
    cap = 128 * 1024 * 1024
    try:
        info = pltpu.get_tpu_info()
        cap = int(getattr(info, "vmem_capacity_bytes", cap))
    except Exception:
        pass
    return int(cap * 0.85)


def _layer_metadata(params):
    """Per-layer (F_in_pad, F_out_pad, hw_first, is_last)."""
    meta = []
    n_layers = len(params)
    for li, (w, _) in enumerate(params):
        fin, fout = w.shape
        fin_p, fout_p = _round_up(fin, 128), _round_up(fout, 128)
        # The Np^2 aggregation matmul should contract over the smaller width:
        #   fout_p <= fin_p  ->  Â @ (H @ W)   (order A)
        #   fin_p  <  fout_p ->  (Â @ H) @ W   (order B)
        hw_first = fout_p <= fin_p
        meta.append((fin_p, fout_p, hw_first, li == n_layers - 1))
    return tuple(meta)


def _gcn_kernel(feat_ref, adj_ref, w_ref, b_ref, out_ref, h_scr, hw_scr,
                *, layer_meta, tm):
    """Grid point (layer l, row tile i).

    feat_ref : (Np, Fin0_p)        bf16   input features (VMEM-resident)
    adj_ref  : (TM, Np)            bf16   streamed Â row block i
    w_ref    : (1, Wi_max, Wo_max) bf16   layer l weight (streamed per layer)
    b_ref    : (1, 1, Wo_max)      f32    layer l bias
    out_ref  : (TM, Cls_p)         f32    last-layer output row block
    h_scr    : (Np, Hw)            bf16   current layer's input H   (scratch)
    hw_scr   : (Np, HWw)           bf16   current layer's H @ W     (scratch)
    """
    l = pl.program_id(0)
    i = pl.program_id(1)
    row0 = pl.multiple_of(i * tm, tm)
    adj_tile = adj_ref[...]                        # (TM, Np) bf16

    def layer_branch(li, meta):
        fin_p, fout_p, hw_first, is_last = meta

        @pl.when(l == li)
        def _():
            if hw_first:
                # Order A: compute HW = H @ W once per layer (row tile 0),
                # then every row tile does the Np^2-sized  Â_tile @ HW.
                @pl.when(i == 0)
                def _():
                    h_full = feat_ref[...] if li == 0 else h_scr[:, :fin_p]
                    hw = jnp.dot(h_full, w_ref[0, :fin_p, :fout_p],
                                 preferred_element_type=jnp.float32)
                    hw_scr[:, :fout_p] = hw.astype(jnp.bfloat16)

                agg = jnp.dot(adj_tile, hw_scr[:, :fout_p],
                              preferred_element_type=jnp.float32)
            else:
                # Order B: (Â_tile @ H) @ W  — better when F_in_pad < F_out_pad.
                h_full = feat_ref[...] if li == 0 else h_scr[:, :fin_p]
                ah = jnp.dot(adj_tile, h_full,
                             preferred_element_type=jnp.float32)
                agg = jnp.dot(ah.astype(jnp.bfloat16),
                              w_ref[0, :fin_p, :fout_p],
                              preferred_element_type=jnp.float32)

            act = agg + b_ref[0, :, :fout_p]       # (1, fout_p) broadcast
            if is_last:
                out_ref[...] = act.astype(out_ref.dtype)
            else:
                h_scr[pl.ds(row0, tm), :fout_p] = (
                    jnp.maximum(act, 0.0).astype(jnp.bfloat16))

    for li, meta in enumerate(layer_meta):
        layer_branch(li, meta)


def prepare_gcn_inputs(adj_norm, features, params):
    """Pad + cast once (cache & reuse across forwards)."""
    n, in_feats = features.shape
    meta = _layer_metadata(params)
    n_pad = _round_up(n, 128)
    fin0_p = meta[0][0]
    wi_max = max(m[0] for m in meta)
    wo_max = max(m[1] for m in meta)
    n_layers = len(params)

    # Zero padding is exact: padded feature columns / node rows stay zero (or
    # only ever accumulate bias) and never leak into real rows because their
    # Â columns and W rows/cols are zero; everything extra is sliced off.
    adj_p = jnp.zeros((n_pad, n_pad), jnp.bfloat16)
    adj_p = adj_p.at[:n, :n].set(adj_norm.astype(jnp.bfloat16))
    feat_p = jnp.zeros((n_pad, fin0_p), jnp.bfloat16)
    feat_p = feat_p.at[:n, :in_feats].set(features.astype(jnp.bfloat16))

    w_stack = jnp.zeros((n_layers, wi_max, wo_max), jnp.bfloat16)
    b_stack = jnp.zeros((n_layers, 1, wo_max), jnp.float32)
    for li, (w, b) in enumerate(params):
        fi, fo = w.shape
        w_stack = w_stack.at[li, :fi, :fo].set(w.astype(jnp.bfloat16))
        b_stack = b_stack.at[li, :, :fo].set(
            b.astype(jnp.float32).reshape(1, fo))
    return adj_p, feat_p, w_stack, b_stack, meta, n_pad


def _pick_row_tile(n_pad, meta, vmem_budget):
    """Row tile TM + scratch widths, sized against the VMEM budget."""
    fin0_p = meta[0][0]
    wi_max = max(m[0] for m in meta)
    wo_max = max(m[1] for m in meta)
    cls_pad = meta[-1][1]
    h_w = max([m[1] for m in meta[:-1]] + [128])           # H scratch width
    hw_w = max([m[1] for m in meta if m[2]] + [128])        # HW scratch width

    def vmem_est(tm):
        adj = 2 * tm * n_pad * 2                 # double-buffered bf16 Â tile
        scr = n_pad * (h_w + hw_w) * 2           # bf16 scratches
        feat = 2 * n_pad * fin0_p * 2            # resident features
        wts = 2 * (wi_max * wo_max * 2 + wo_max * 4)
        out = 2 * tm * cls_pad * 4
        return adj + scr + feat + wts + out

    tm = 128
    for cand in (512, 256):                      # bigger tiles when they fit
        if n_pad % cand == 0:
            tm = cand
            break
    while tm > 128 and vmem_est(tm) > vmem_budget:
        tm //= 2
    return tm, h_w, hw_w


def gcn_forward_padded(adj_p, feat_p, w_stack, b_stack, meta, n_pad):
    n_layers = len(meta)
    fin0_p = feat_p.shape[1]
    wi_max, wo_max = w_stack.shape[1], w_stack.shape[2]
    cls_pad = meta[-1][1]

    vmem_budget = _vmem_limit_bytes()
    tm, h_w, hw_w = _pick_row_tile(n_pad, meta, vmem_budget)
    n_row_tiles = n_pad // tm

    kernel = functools.partial(_gcn_kernel, layer_meta=meta, tm=tm)
    out_p = pl.pallas_call(
        kernel,
        out_shape=jax.ShapeDtypeStruct((n_pad, cls_pad), jnp.float32),
        grid=(n_layers, n_row_tiles),
        in_specs=[
            pl.BlockSpec((n_pad, fin0_p), lambda l, i: (0, 0)),       # features
            pl.BlockSpec((tm, n_pad), lambda l, i: (i, 0)),           # Â rows
            pl.BlockSpec((1, wi_max, wo_max), lambda l, i: (l, 0, 0)),  # W_l
            pl.BlockSpec((1, 1, wo_max), lambda l, i: (l, 0, 0)),       # b_l
        ],
        out_specs=pl.BlockSpec((tm, cls_pad), lambda l, i: (i, 0)),
        scratch_shapes=[
            pltpu.VMEM((n_pad, h_w), jnp.bfloat16),    # H (layer input)
            pltpu.VMEM((n_pad, hw_w), jnp.bfloat16),   # H @ W_l
        ],
        compiler_params=pltpu.CompilerParams(
            # Layer axis is sequential; the row axis feeds per-core scratch
            # consumed by the next layer's row-tile-0 HW matmul, so it cannot
            # be megacore-sharded either.
            dimension_semantics=("arbitrary", "arbitrary"),
            vmem_limit_bytes=vmem_budget,
        ),
    )(feat_p, adj_p, w_stack, b_stack)
    return out_p


def gcn_forward(adj_norm, features, params, n_classes):
    """Fused GCN forward. Returns (N, n_classes) float32 logits."""
    n = features.shape[0]
    adj_p, feat_p, w_stack, b_stack, meta, n_pad = prepare_gcn_inputs(
        adj_norm, features, params)
    out_p = gcn_forward_padded(adj_p, feat_p, w_stack, b_stack, meta, n_pad)
    return out_p[:n, :n_classes]


def build_normalized_adjacency(key, n_nodes):
    """Random symmetric graph + self loops; Â = D^{-1/2} A D^{-1/2}."""
    a = (jax.random.uniform(key, (n_nodes, n_nodes)) < 0.15).astype(jnp.float32)
    a = jnp.maximum(a, a.T)                                    # symmetric
    a = jnp.maximum(a, jnp.eye(n_nodes, dtype=jnp.float32))    # self loops
    deg = a.sum(axis=1)
    d_inv_sqrt = jax.lax.rsqrt(deg)
    return a * d_inv_sqrt[:, None] * d_inv_sqrt[None, :]


def init_params(key, in_feats, n_hidden, n_classes, n_layers):
    """GraphConv weight (F_in, F_out) Glorot-ish init + zero bias."""
    dims = [in_feats] + [n_hidden] * n_layers + [n_classes]
    params = []
    for li in range(len(dims) - 1):
        f_in, f_out = dims[li], dims[li + 1]
        key, wk = jax.random.split(key)
        scale = jnp.sqrt(2.0 / (f_in + f_out))
        w = scale * jax.random.normal(wk, (f_in, f_out), dtype=jnp.float32)
        b = jnp.zeros((1, f_out), dtype=jnp.float32)
        params.append((w, b))
    return params


def gcn_reference(adj_norm, features, params):
    """Pure-JAX reference mirroring the kernel's bf16/f32 math and per-layer
    matmul association."""
    meta = _layer_metadata(params)
    adj = adj_norm.astype(jnp.bfloat16)
    h = features.astype(jnp.bfloat16)
    out = None
    for (w, b), (fin_p, fout_p, hw_first, is_last) in zip(params, meta):
        w_bf = w.astype(jnp.bfloat16)
        if hw_first:
            hw = jnp.dot(h, w_bf, preferred_element_type=jnp.float32)
            agg = jnp.dot(adj, hw.astype(jnp.bfloat16),
                          preferred_element_type=jnp.float32)
        else:
            ah = jnp.dot(adj, h, preferred_element_type=jnp.float32)
            agg = jnp.dot(ah.astype(jnp.bfloat16), w_bf,
                          preferred_element_type=jnp.float32)
        act = agg + b.astype(jnp.float32)
        if not is_last:
            h = jnp.maximum(act, 0.0).astype(jnp.bfloat16)
        else:
            out = act
    return out


if __name__ == "__main__":
    # Small, forward-consistent shapes.
    N_NODES = 64
    IN_FEATS = 16
    N_HIDDEN = 32
    N_CLASSES = 8
    N_LAYERS = 2          # -> total GraphConv layers = N_LAYERS + 1 = 3

    root = jax.random.PRNGKey(0)
    k_adj, k_feat, k_par = jax.random.split(root, 3)

    adj_norm = build_normalized_adjacency(k_adj, N_NODES)
    features = jax.random.normal(k_feat, (N_NODES, IN_FEATS), dtype=jnp.float32)
    params = init_params(k_par, IN_FEATS, N_HIDDEN, N_CLASSES, N_LAYERS)

    out = gcn_forward(adj_norm, features, params, N_CLASSES)
    out = jax.block_until_ready(out)

    assert out.shape == (N_NODES, N_CLASSES)
    assert jnp.all(jnp.isfinite(out))

    ref = gcn_reference(adj_norm, features, params)
    max_err = float(jnp.max(jnp.abs(out - ref)))
    assert jnp.allclose(out, ref, atol=5e-2, rtol=5e-2), max_err

    print("KERNEL_OK")
</pallas_src>

<mosaic_0001>
module attributes {stable_mosaic.version = 11 : i64} {
  func.func @_gcn_kernel(%arg0: i32, %arg1: i32, %arg2: memref<128x128xbf16, #tpu.memory_space<vmem>>, %arg3: memref<128x128xbf16, #tpu.memory_space<vmem>>, %arg4: memref<1x128x128xbf16, #tpu.memory_space<vmem>>, %arg5: memref<1x1x128xf32, #tpu.memory_space<vmem>>, %arg6: memref<128x128xf32, #tpu.memory_space<vmem>>, %arg7: memref<128x128xbf16, #tpu.memory_space<vmem>>, %arg8: memref<128x128xbf16, #tpu.memory_space<vmem>>) attributes {dimension_semantics = [#tpu.dimension_semantics<arbitrary>, #tpu.dimension_semantics<arbitrary>], iteration_bounds = array<i64: 3, 1>, scalar_prefetch = 0 : i64, scratch_operands = 2 : i64, tpu.core_type = #tpu.core_type<tc>, window_params = [{pipeline_mode = #tpu.pipeline_mode<synchronous>, transform_indices = @transform_0, window_bounds = array<i64: 128, 128>}, {transform_indices = @transform_1, window_bounds = array<i64: 128, 128>}, {transform_indices = @transform_2, window_bounds = array<i64: 1, 128, 128>}, {transform_indices = @transform_3, window_bounds = array<i64: 1, 1, 128>}, {transform_indices = @transform_4, window_bounds = array<i64: 128, 128>}]} {
    %c128_i32 = arith.constant 128 : i32
    %0 = arith.muli %arg1, %c128_i32 : i32
    %1 = tpu.assume_multiple %0, 128 : i32
    %c0 = arith.constant 0 : index
    %c0_0 = arith.constant 0 : index
    %2 = vector.load %arg3[%c0, %c0_0] : memref<128x128xbf16, #tpu.memory_space<vmem>>, vector<128x128xbf16>
    %c0_i32 = arith.constant 0 : i32
    %3 = arith.cmpi eq, %arg0, %c0_i32 : i32
    %4 = arith.extui %3 : i1 to i32
    %c0_i32_1 = arith.constant 0 : i32
    %5 = arith.cmpi ne, %4, %c0_i32_1 : i32
    scf.if %5 {
      %c0_i32_4 = arith.constant 0 : i32
      %12 = arith.cmpi eq, %arg1, %c0_i32_4 : i32
      %13 = arith.extui %12 : i1 to i32
      %c0_i32_5 = arith.constant 0 : i32
      %14 = arith.cmpi ne, %13, %c0_i32_5 : i32
      scf.if %14 {
        %c0_13 = arith.constant 0 : index
        %c0_14 = arith.constant 0 : index
        %26 = vector.load %arg2[%c0_13, %c0_14] : memref<128x128xbf16, #tpu.memory_space<vmem>>, vector<128x128xbf16>
        %c0_15 = arith.constant 0 : index
        %c0_16 = arith.constant 0 : index
        %c0_17 = arith.constant 0 : index
        %27 = vector.load %arg4[%c0_15, %c0_16, %c0_17] : memref<1x128x128xbf16, #tpu.memory_space<vmem>>, vector<1x128x128xbf16>
        %28 = vector.shape_cast %27 : vector<1x128x128xbf16> to vector<128x128xbf16>
        %cst_18 = arith.constant dense<0.000000e+00> : vector<128x128xf32>
        %29 = tpu.matmul %26, %28, %cst_18 {dimension_numbers = #tpu.dot_dimension_numbers<[1], [0], [0], [1], [0, 0, 1, 1], [], []>} : vector<128x128xbf16>, vector<128x128xbf16>, vector<128x128xf32> -> vector<128x128xf32>
        %30 = arith.truncf %29 : vector<128x128xf32> to vector<128x128xbf16>
        %c0_19 = arith.constant 0 : index
        %c0_20 = arith.constant 0 : index
        %31 = vector.load %arg8[%c0_19, %c0_20] : memref<128x128xbf16, #tpu.memory_space<vmem>>, vector<128x128xbf16>
        tpu.vector_store %arg8[%c0_19, %c0_20], %30 {strides = array<i32>} : memref<128x128xbf16, #tpu.memory_space<vmem>>, vector<128x128xbf16>,
      } else {
      }
      %c0_6 = arith.constant 0 : index
      %c0_7 = arith.constant 0 : index
      %15 = vector.load %arg8[%c0_6, %c0_7] : memref<128x128xbf16, #tpu.memory_space<vmem>>, vector<128x128xbf16>
      %cst = arith.constant dense<0.000000e+00> : vector<128x128xf32>
      %16 = tpu.matmul %2, %15, %cst {dimension_numbers = #tpu.dot_dimension_numbers<[1], [0], [0], [1], [0, 0, 1, 1], [], []>} : vector<128x128xbf16>, vector<128x128xbf16>, vector<128x128xf32> -> vector<128x128xf32>
      %c0_8 = arith.constant 0 : index
      %c0_9 = arith.constant 0 : index
      %c0_10 = arith.constant 0 : index
      %17 = vector.load %arg5[%c0_8, %c0_9, %c0_10] : memref<1x1x128xf32, #tpu.memory_space<vmem>>, vector<1x1x128xf32>
      %18 = vector.shape_cast %17 : vector<1x1x128xf32> to vector<1x128xf32>
      %19 = vector.broadcast %18 : vector<1x128xf32> to vector<128x128xf32>
      %20 = arith.addf %16, %19 : vector<128x128xf32>
      %cst_11 = arith.constant 0.000000e+00 : f32
      %21 = vector.broadcast %cst_11 : f32 to vector<128x128xf32>
      %22 = arith.maximumf %20, %21 : vector<128x128xf32>
      %23 = arith.truncf %22 : vector<128x128xf32> to vector<128x128xbf16>
      %24 = arith.index_cast %1 : i32 to index
      %c0_12 = arith.constant 0 : index
      %25 = vector.load %arg7[%24, %c0_12] : memref<128x128xbf16, #tpu.memory_space<vmem>>, vector<128x128xbf16>
      tpu.vector_store %arg7[%24, %c0_12], %23 {strides = array<i32>} : memref<128x128xbf16, #tpu.memory_space<vmem>>, vector<128x128xbf16>,
    } else {
    }
    %c1_i32 = arith.constant 1 : i32
    %6 = arith.cmpi eq, %arg0, %c1_i32 : i32
    %7 = arith.extui %6 : i1 to i32
    %c0_i32_2 = arith.constant 0 : i32
    %8 = arith.cmpi ne, %7, %c0_i32_2 : i32
    scf.if %8 {
      %c0_i32_4 = arith.constant 0 : i32
      %12 = arith.cmpi eq, %arg1, %c0_i32_4 : i32
      %13 = arith.extui %12 : i1 to i32
      %c0_i32_5 = arith.constant 0 : i32
      %14 = arith.cmpi ne, %13, %c0_i32_5 : i32
      scf.if %14 {
        %c0_13 = arith.constant 0 : index
        %c0_14 = arith.constant 0 : index
        %26 = vector.load %arg7[%c0_13, %c0_14] : memref<128x128xbf16, #tpu.memory_space<vmem>>, vector<128x128xbf16>
        %c0_15 = arith.constant 0 : index
        %c0_16 = arith.constant 0 : index
        %c0_17 = arith.constant 0 : index
        %27 = vector.load %arg4[%c0_15, %c0_16, %c0_17] : memref<1x128x128xbf16, #tpu.memory_space<vmem>>, vector<1x128x128xbf16>
        %28 = vector.shape_cast %27 : vector<1x128x128xbf16> to vector<128x128xbf16>
        %cst_18 = arith.constant dense<0.000000e+00> : vector<128x128xf32>
        %29 = tpu.matmul %26, %28, %cst_18 {dimension_numbers = #tpu.dot_dimension_numbers<[1], [0], [0], [1], [0, 0, 1, 1], [], []>} : vector<128x128xbf16>, vector<128x128xbf16>, vector<128x128xf32> -> vector<128x128xf32>
        %30 = arith.truncf %29 : vector<128x128xf32> to vector<128x128xbf16>
        %c0_19 = arith.constant 0 : index
        %c0_20 = arith.constant 0 : index
        %31 = vector.load %arg8[%c0_19, %c0_20] : memref<128x128xbf16, #tpu.memory_space<vmem>>, vector<128x128xbf16>
        tpu.vector_store %arg8[%c0_19, %c0_20], %30 {strides = array<i32>} : memref<128x128xbf16, #tpu.memory_space<vmem>>, vector<128x128xbf16>,
      } else {
      }
      %c0_6 = arith.constant 0 : index
      %c0_7 = arith.constant 0 : index
      %15 = vector.load %arg8[%c0_6, %c0_7] : memref<128x128xbf16, #tpu.memory_space<vmem>>, vector<128x128xbf16>
      %cst = arith.constant dense<0.000000e+00> : vector<128x128xf32>
      %16 = tpu.matmul %2, %15, %cst {dimension_numbers = #tpu.dot_dimension_numbers<[1], [0], [0], [1], [0, 0, 1, 1], [], []>} : vector<128x128xbf16>, vector<128x128xbf16>, vector<128x128xf32> -> vector<128x128xf32>
      %c0_8 = arith.constant 0 : index
      %c0_9 = arith.constant 0 : index
      %c0_10 = arith.constant 0 : index
      %17 = vector.load %arg5[%c0_8, %c0_9, %c0_10] : memref<1x1x128xf32, #tpu.memory_space<vmem>>, vector<1x1x128xf32>
      %18 = vector.shape_cast %17 : vector<1x1x128xf32> to vector<1x128xf32>
      %19 = vector.broadcast %18 : vector<1x128xf32> to vector<128x128xf32>
      %20 = arith.addf %16, %19 : vector<128x128xf32>
      %cst_11 = arith.constant 0.000000e+00 : f32
      %21 = vector.broadcast %cst_11 : f32 to vector<128x128xf32>
      %22 = arith.maximumf %20, %21 : vector<128x128xf32>
      %23 = arith.truncf %22 : vector<128x128xf32> to vector<128x128xbf16>
      %24 = arith.index_cast %1 : i32 to index
      %c0_12 = arith.constant 0 : index
      %25 = vector.load %arg7[%24, %c0_12] : memref<128x128xbf16, #tpu.memory_space<vmem>>, vector<128x128xbf16>
      tpu.vector_store %arg7[%24, %c0_12], %23 {strides = array<i32>} : memref<128x128xbf16, #tpu.memory_space<vmem>>, vector<128x128xbf16>,
    } else {
    }
    %c2_i32 = arith.constant 2 : i32
    %9 = arith.cmpi eq, %arg0, %c2_i32 : i32
    %10 = arith.extui %9 : i1 to i32
    %c0_i32_3 = arith.constant 0 : i32
    %11 = arith.cmpi ne, %10, %c0_i32_3 : i32
    scf.if %11 {
      %c0_i32_4 = arith.constant 0 : i32
      %12 = arith.cmpi eq, %arg1, %c0_i32_4 : i32
      %13 = arith.extui %12 : i1 to i32
      %c0_i32_5 = arith.constant 0 : i32
      %14 = arith.cmpi ne, %13, %c0_i32_5 : i32
      scf.if %14 {
        %c0_13 = arith.constant 0 : index
        %c0_14 = arith.constant 0 : index
        %22 = vector.load %arg7[%c0_13, %c0_14] : memref<128x128xbf16, #tpu.memory_space<vmem>>, vector<128x128xbf16>
        %c0_15 = arith.constant 0 : index
        %c0_16 = arith.constant 0 : index
        %c0_17 = arith.constant 0 : index
        %23 = vector.load %arg4[%c0_15, %c0_16, %c0_17] : memref<1x128x128xbf16, #tpu.memory_space<vmem>>, vector<1x128x128xbf16>
        %24 = vector.shape_cast %23 : vector<1x128x128xbf16> to vector<128x128xbf16>
        %cst_18 = arith.constant dense<0.000000e+00> : vector<128x128xf32>
        %25 = tpu.matmul %22, %24, %cst_18 {dimension_numbers = #tpu.dot_dimension_numbers<[1], [0], [0], [1], [0, 0, 1, 1], [], []>} : vector<128x128xbf16>, vector<128x128xbf16>, vector<128x128xf32> -> vector<128x128xf32>
        %26 = arith.truncf %25 : vector<128x128xf32> to vector<128x128xbf16>
        %c0_19 = arith.constant 0 : index
        %c0_20 = arith.constant 0 : index
        %27 = vector.load %arg8[%c0_19, %c0_20] : memref<128x128xbf16, #tpu.memory_space<vmem>>, vector<128x128xbf16>
        tpu.vector_store %arg8[%c0_19, %c0_20], %26 {strides = array<i32>} : memref<128x128xbf16, #tpu.memory_space<vmem>>, vector<128x128xbf16>,
      } else {
      }
      %c0_6 = arith.constant 0 : index
      %c0_7 = arith.constant 0 : index
      %15 = vector.load %arg8[%c0_6, %c0_7] : memref<128x128xbf16, #tpu.memory_space<vmem>>, vector<128x128xbf16>
      %cst = arith.constant dense<0.000000e+00> : vector<128x128xf32>
      %16 = tpu.matmul %2, %15, %cst {dimension_numbers = #tpu.dot_dimension_numbers<[1], [0], [0], [1], [0, 0, 1, 1], [], []>} : vector<128x128xbf16>, vector<128x128xbf16>, vector<128x128xf32> -> vector<128x128xf32>
      %c0_8 = arith.constant 0 : index
      %c0_9 = arith.constant 0 : index
      %c0_10 = arith.constant 0 : index
      %17 = vector.load %arg5[%c0_8, %c0_9, %c0_10] : memref<1x1x128xf32, #tpu.memory_space<vmem>>, vector<1x1x128xf32>
      %18 = vector.shape_cast %17 : vector<1x1x128xf32> to vector<1x128xf32>
      %19 = vector.broadcast %18 : vector<1x128xf32> to vector<128x128xf32>
      %20 = arith.addf %16, %19 : vector<128x128xf32>
      %c0_11 = arith.constant 0 : index
      %c0_12 = arith.constant 0 : index
      %21 = vector.load %arg6[%c0_11, %c0_12] : memref<128x128xf32, #tpu.memory_space<vmem>>, vector<128x128xf32>
      tpu.vector_store %arg6[%c0_11, %c0_12], %20 {strides = array<i32>} : memref<128x128xf32, #tpu.memory_space<vmem>>, vector<128x128xf32>,
    } else {
    }
    return
  }
  func.func @transform_0(%arg0: i32, %arg1: i32) -> (i32, i32) {
    %c0_i32 = arith.constant 0 : i32
    %c0_i32_0 = arith.constant 0 : i32
    %c0_i32_1 = arith.constant 0 : i32
    return %c0_i32, %c0_i32_0 : i32, i32
  }
  func.func @transform_1(%arg0: i32, %arg1: i32) -> (i32, i32) {
    %c0_i32 = arith.constant 0 : i32
    %c0_i32_0 = arith.constant 0 : i32
    return %arg1, %c0_i32 : i32, i32
  }
  func.func @transform_2(%arg0: i32, %arg1: i32) -> (i32, i32, i32) {
    %c0_i32 = arith.constant 0 : i32
    %c0_i32_0 = arith.constant 0 : i32
    %c0_i32_1 = arith.constant 0 : i32
    return %arg0, %c0_i32, %c0_i32_0 : i32, i32, i32
  }
  func.func @transform_3(%arg0: i32, %arg1: i32) -> (i32, i32, i32) {
    %c0_i32 = arith.constant 0 : i32
    %c0_i32_0 = arith.constant 0 : i32
    %c0_i32_1 = arith.constant 0 : i32
    return %arg0, %c0_i32, %c0_i32_0 : i32, i32, i32
  }
  func.func @transform_4(%arg0: i32, %arg1: i32) -> (i32, i32) {
    %c0_i32 = arith.constant 0 : i32
    %c0_i32_0 = arith.constant 0 : i32
    return %arg1, %c0_i32 : i32, i32
  }
}

</mosaic_0001>

<llo_original>
// kernel: tpu_custom_call.1
$region0: #{tpu_custom_call.1}
  #allocation0 [shape = 'u32[]', space=smem, size = 0x4, offset = 0x4, fixed_abs, tag = 'smem constant byte address 0x4 - core index']
  #allocation1 [shape = 'u32[144,128]{1,0:T(1,128)}', space=vmem, size = 0x12000, scoped, tag = 'internal scratch']
  #allocation2 [shape = 'bf16[128,128]{1,0:T(8,128)(2,1)}', space=vmem, size = 0x8000, scoped, tag = 'scratch operand']
  #allocation3 [shape = 'bf16[128,128]{1,0:T(8,128)(2,1)}', space=vmem, size = 0x8000, scoped, tag = 'scratch operand']
  %s0 = inlined_call_operand.hbm [shape: bf16[128,128], index: 0, kind: input, shape index: {}]
  %s1 = inlined_call_operand.hbm [shape: bf16[128,128], index: 1, kind: input, shape index: {}]
  %s2 = inlined_call_operand.hbm [shape: bf16[3,128,128], index: 2, kind: input, shape index: {}]
  %s3 = inlined_call_operand.vmem [shape: f32[3,1,128], index: 3, kind: input, shape index: {}]
  %s4 = inlined_call_operand.hbm [shape: f32[128,128], index: 4, kind: output, shape index: {}]
  %s5 = sld [smem:[#allocation0]]
  $region85: #{tpu_custom_call.1} parent=0
    _
  %s7 = ssub.s32 1, %s5
  %s8 = scalar_select 0, %s7, %s5
  $region1: #{tpu_custom_call.1} parent=0
    #allocation4 [shape = 'u8[32768]{0}', space=vmem, size = 0x8000, scoped, tag = 'input window, operand 0, single buffered']
    #allocation5 [shape = 's32[2]{0}', space=sflag, size = 0x8, scoped, tag = 'scoped memory for tpu_custom_call.1']
    #allocation6 [shape = 's32[2]{0}', space=sflag, size = 0x8, scoped, tag = 'scoped memory for tpu_custom_call.1']
    #allocation7 [shape = 'u8[32768]{0}', space=vmem, size = 0x8000, scoped, tag = 'input window, operand 1, single buffered']
    #allocation8 [shape = 's32[1]{0}', space=sflag, size = 0x4, scoped, tag = 'scoped memory for tpu_custom_call.1']
    #allocation9 [shape = 'u8[65536]{0}', space=vmem, size = 0x10000, scoped, tag = 'input window, operand 2']
    #allocation10 [shape = 'u8[65536]{0}', space=vmem, size = 0x10000, scoped, tag = 'output window, operand 0, single buffered']
    %9 = vsyncpa [#allocation5], 0
    %10 = vsyncpa [#allocation8], 0
    %11 = vsyncpa [#allocation6], 0
    loop: start=0, step=1, limit=5
    $region2: #{tpu_custom_call.1} parent=1 // loop_pre_header
      _
    $region3: #{tpu_custom_call.1} parent=1 // loop_header
      %s13 = sphi 0, %s17
      %p14 = scmp.ge.s32.totalorder %s13, 5
      %s20 = sphi 0, %s32
      %s21 = sphi 0, %s28
      %s22 = sphi 0, %s20
      %s23 = sphi 0, %s21
      %s24 = sphi 0, %s22
      %s25 = sphi 0, %s23
      %s33 = sphi 0, %s33
      %s35 = sphi 0, %s33
      %s36 = sphi 0, %s35
      %s50 = sphi 0, %s36
      %s56 = sphi 0, %s58
      %s59 = sphi 0, %s56
      %s60 = sphi 0, %s59
      %s76 = sphi 0, %s60
      %s82 = sphi 0, %s84
      %s85 = sphi 0, %s82
      %s86 = sphi 0, %s85
      %s102 = sphi 0, %s86
      %s108 = sphi 0, %s110
      %s111 = sphi 0, %s108
      %s112 = sphi 0, %s111
      %s128 = sphi 0, %s112
      %s134 = sphi 0, %s136
      %s137 = sphi 0, %s134
      %s138 = sphi 0, %s137
      %s154 = sphi 0, %s138
    $region4: #{tpu_custom_call.1} parent=1 // loop_header_branch
      %16 = sbr.rel (%p14) target = $region8
    $region5: #{tpu_custom_call.1} parent=1 // loop_body
      %s18 = ssub.s32 %s13, 1
      %s19 = ssub.s32 %s13, 2
      %s26 = sadd.s32 1, %s21
      %p27 = scmp.ge.s32.totalorder %s26, 1
      %s28 = scalar_select %p27, 0, %s26
      %s29 = sadd.s32 1, %s20
      %s30 = scalar_select %p27, %s29, %s20
      %p31 = scmp.ge.s32.totalorder %s30, 3
      %s32 = scalar_select %p31, 0, %s30
      %s34 = sadd.s32 %s33, 1
      %p37 = scmp.eq.s32.totalorder %s13, 2
      %p38 = scmp.ne.s32.totalorder %s33, %s35
      %p39 = scmp.eq.s32.totalorder %s13, 0
      %p40 = por %p38, %p39
      %p41 = scmp.ne.s32.totalorder %s33, %s35
      %p42 = scmp.eq.s32.totalorder %s18, 2
      %p43 = por %p41, %p42
      %p44 = scmp.ne.s32.totalorder %s35, %s36
      %p45 = scmp.eq.s32.totalorder %s18, 0
      %p46 = por %p44, %p45
      %p47 = scmp.ne.s32.totalorder %s35, %s36
      %p48 = scmp.eq.s32.totalorder %s19, 2
      %p49 = por %p47, %p48
      %p51 = scmp.ne.s32.totalorder %s36, %s50
      %p52 = scmp.eq.s32.totalorder %s19, 0
      %p53 = por %p51, %p52
      %s54 = ssub.s32 %s21, %s28
      %p55 = scmp.eq.s32.totalorder %s54, 0
      %s57 = sadd.s32 %s56, 1
      %s58 = scalar_select %p55, %s56, %s57
      %p61 = pneg %p55
      %p62 = scmp.eq.s32.totalorder %s13, 2
      %p63 = por %p61, %p62
      %p64 = scmp.ne.s32.totalorder %s56, %s59
      %p65 = scmp.eq.s32.totalorder %s13, 0
      %p66 = por %p64, %p65
      %p67 = scmp.ne.s32.totalorder %s56, %s59
      %p68 = scmp.eq.s32.totalorder %s18, 2
      %p69 = por %p67, %p68
      %p70 = scmp.ne.s32.totalorder %s59, %s60
      %p71 = scmp.eq.s32.totalorder %s18, 0
      %p72 = por %p70, %p71
      %p73 = scmp.ne.s32.totalorder %s59, %s60
      %p74 = scmp.eq.s32.totalorder %s19, 2
      %p75 = por %p73, %p74
      %p77 = scmp.ne.s32.totalorder %s60, %s76
      %p78 = scmp.eq.s32.totalorder %s19, 0
      %p79 = por %p77, %p78
      %s80 = ssub.s32 %s20, %s32
      %p81 = scmp.eq.s32.totalorder %s80, 0
      %s83 = sadd.s32 %s82, 1
      %s84 = scalar_select %p81, %s82, %s83
      %p87 = pneg %p81
      %p88 = scmp.eq.s32.totalorder %s13, 2
      %p89 = por %p87, %p88
      %p90 = scmp.ne.s32.totalorder %s82, %s85
      %p91 = scmp.eq.s32.totalorder %s13, 0
      %p92 = por %p90, %p91
      %p93 = scmp.ne.s32.totalorder %s82, %s85
      %p94 = scmp.eq.s32.totalorder %s18, 2
      %p95 = por %p93, %p94
      %p96 = scmp.ne.s32.totalorder %s85, %s86
      %p97 = scmp.eq.s32.totalorder %s18, 0
      %p98 = por %p96, %p97
      %p99 = scmp.ne.s32.totalorder %s85, %s86
      %p100 = scmp.eq.s32.totalorder %s19, 2
      %p101 = por %p99, %p100
      %p103 = scmp.ne.s32.totalorder %s86, %s102
      %p104 = scmp.eq.s32.totalorder %s19, 0
      %p105 = por %p103, %p104
      %s106 = ssub.s32 %s20, %s32
      %p107 = scmp.eq.s32.totalorder %s106, 0
      %s109 = sadd.s32 %s108, 1
      %s110 = scalar_select %p107, %s108, %s109
      %p113 = pneg %p107
      %p114 = scmp.eq.s32.totalorder %s13, 2
      %p115 = por %p113, %p114
      %p116 = scmp.ne.s32.totalorder %s108, %s111
      %p117 = scmp.eq.s32.totalorder %s13, 0
      %p118 = por %p116, %p117
      %p119 = scmp.ne.s32.totalorder %s108, %s111
      %p120 = scmp.eq.s32.totalorder %s18, 2
      %p121 = por %p119, %p120
      %p122 = scmp.ne.s32.totalorder %s111, %s112
      %p123 = scmp.eq.s32.totalorder %s18, 0
      %p124 = por %p122, %p123
      %p125 = scmp.ne.s32.totalorder %s111, %s112
      %p126 = scmp.eq.s32.totalorder %s19, 2
      %p127 = por %p125, %p126
      %p129 = scmp.ne.s32.totalorder %s112, %s128
      %p130 = scmp.eq.s32.totalorder %s19, 0
      %p131 = por %p129, %p130
      %s132 = ssub.s32 %s21, %s28
      %p133 = scmp.eq.s32.totalorder %s132, 0
      %s135 = sadd.s32 %s134, 1
      %s136 = scalar_select %p133, %s134, %s135
      %p139 = pneg %p133
      %p140 = scmp.eq.s32.totalorder %s13, 2
      %p141 = por %p139, %p140
      %p142 = scmp.ne.s32.totalorder %s134, %s137
      %p143 = scmp.eq.s32.totalorder %s13, 0
      %p144 = por %p142, %p143
      %p145 = scmp.ne.s32.totalorder %s134, %s137
      %p146 = scmp.eq.s32.totalorder %s18, 2
      %p147 = por %p145, %p146
      %p148 = scmp.ne.s32.totalorder %s137, %s138
      %p149 = scmp.eq.s32.totalorder %s18, 0
      %p150 = por %p148, %p149
      %p151 = scmp.ne.s32.totalorder %s137, %s138
      %p152 = scmp.eq.s32.totalorder %s19, 2
      %p153 = por %p151, %p152
      %p155 = scmp.ne.s32.totalorder %s138, %s154
      %p156 = scmp.eq.s32.totalorder %s19, 0
      %p157 = por %p155, %p156
      %p158 = scmp.le.s32.totalorder 1, %s13
      %p159 = scmp.lt.s32.totalorder %s13, 4
      %p160 = pnand %p158, %p159
      %p161 = pneg %p160
      // Predicated region
      $region9: #{tpu_custom_call.1} parent=5 // pred_check
        _
      $region10: #{tpu_custom_call.1} parent=5 // pred_check_branch
        %163 = sbr.rel (%p160) target = $region12
      $region11: #{tpu_custom_call.1} parent=5 // pred_region
        %s164 = ssub.s32 %s13, 1
        // Predicated region
        $region13: #{tpu_custom_call.1} parent=11 // pred_check
          %p165 = pneg %p46
        $region14: #{tpu_custom_call.1} parent=11 // pred_check_branch
          %167 = sbr.rel (%p165) target = $region16
        $region15: #{tpu_custom_call.1} parent=11 // pred_region
          %s169 = ssub.s32 1024, 1024
          %170 = vsyncadd [#allocation5], %s169
          %s171 = sshll.u32 [#allocation4], 4
          %s172 = int_to_ptr.vmem [resolvable:$true] %s171
          %177 = dma.hbm_to_vmem [thread:$0]  %s0, 1024, %s172, [#allocation5], 64, 64, 4
        $region16: #{tpu_custom_call.1} parent=11 // pred_fallthru
          _
        // Predicated region
        $region17: #{tpu_custom_call.1} parent=11 // pred_check
          %p178 = pneg %p72
        $region18: #{tpu_custom_call.1} parent=11 // pred_check_branch
          %180 = sbr.rel (%p178) target = $region20
        $region19: #{tpu_custom_call.1} parent=11 // pred_region
          %s181 = smul.u32 16, %s23
          %s183 = ssub.s32 1024, 1024
          %184 = vsyncadd [#allocation8], %s183
          %s185 = smul.addr %s181, 64
          %s186 = scalar_lea.hbm %s1, %s185
          %s187 = sshll.u32 [#allocation7], 4
          %s188 = int_to_ptr.vmem [resolvable:$true] %s187
          %193 = dma.hbm_to_vmem [thread:$0]  %s186, 1024, %s188, [#allocation8], 64, 64, 4
        $region20: #{tpu_custom_call.1} parent=11 // pred_fallthru
          _
      $region12: #{tpu_custom_call.1} parent=5 // pred_fallthru
        _
      %p194 = scmp.lt.s32.totalorder %s13, 3
      // Predicated region
      $region21: #{tpu_custom_call.1} parent=5 // pred_check
        %p195 = pneg %p194
      $region22: #{tpu_custom_call.1} parent=5 // pred_check_branch
        %197 = sbr.rel (%p195) target = $region24
      $region23: #{tpu_custom_call.1} parent=5 // pred_region
        // Predicated region
        $region25: #{tpu_custom_call.1} parent=23 // pred_check
          %p198 = pneg %p92
        $region26: #{tpu_custom_call.1} parent=23 // pred_check_branch
          %200 = sbr.rel (%p198) target = $region28
        $region27: #{tpu_custom_call.1} parent=23 // pred_region
          %s201 = sand.u32 %s13, 1
          %s202 = scalar_lea.sflag [#allocation5], %s201
          %s203 = sand.u32 %s82, 1
          %s204 = smul.addr %s203, 64
          %s205 = scalar_lea.vmem [#allocation9], %s204
          %s207 = ssub.s32 1024, 1024
          %208 = vsyncadd %s202, %s207
          %s209 = smul.addr %s20, 16
          %s210 = smul.addr %s209, 64
          %s211 = scalar_lea.hbm %s2, %s210
          %s212 = sshll.u32 %s205, 4
          %s213 = int_to_ptr.vmem [resolvable:$true] %s212
          %218 = dma.hbm_to_vmem [thread:$0]  %s211, 1024, %s213, %s202, 64, 64, 4
        $region28: #{tpu_custom_call.1} parent=23 // pred_fallthru
          _
        // Predicated region
        $region29: #{tpu_custom_call.1} parent=23 // pred_check
          %p219 = pneg %p118
        $region30: #{tpu_custom_call.1} parent=23 // pred_check_branch
          %221 = sbr.rel (%p219) target = $region32
        $region31: #{tpu_custom_call.1} parent=23 // pred_region
          %p222 = scmp.lt.s32.totalorder %s20, 2
          %s223 = scalar_select %p222, %s20, 2
          %s224 = scalar_lea.vmem %s3, %s223
        $region32: #{tpu_custom_call.1} parent=23 // pred_fallthru
          _
      $region24: #{tpu_custom_call.1} parent=5 // pred_fallthru
        _
      %p225 = scmp.le.s32.totalorder 1, %s13
      %p226 = scmp.lt.s32.totalorder %s13, 4
      %p227 = pnand %p225, %p226
      %p228 = pneg %p227
      // Predicated region
      $region33: #{tpu_custom_call.1} parent=5 // pred_check
        _
      $region34: #{tpu_custom_call.1} parent=5 // pred_check_branch
        %230 = sbr.rel (%p227) target = $region36
      $region35: #{tpu_custom_call.1} parent=5 // pred_region
        %s231 = ssub.s32 %s13, 1
        // Predicated region
        $region37: #{tpu_custom_call.1} parent=35 // pred_check
          %p232 = pneg %p46
        $region38: #{tpu_custom_call.1} parent=35 // pred_check_branch
          %234 = sbr.rel (%p232) target = $region40
        $region39: #{tpu_custom_call.1} parent=35 // pred_region
          %235 = dma.done [#allocation5], 1024
        $region40: #{tpu_custom_call.1} parent=35 // pred_fallthru
          _
        // Predicated region
        $region41: #{tpu_custom_call.1} parent=35 // pred_check
          %p236 = pneg %p72
        $region42: #{tpu_custom_call.1} parent=35 // pred_check_branch
          %238 = sbr.rel (%p236) target = $region44
        $region43: #{tpu_custom_call.1} parent=35 // pred_region
          %239 = dma.done [#allocation8], 1024
        $region44: #{tpu_custom_call.1} parent=35 // pred_fallthru
          _
        %s240 = sand.u32 %s18, 1
        %s241 = scalar_lea.sflag [#allocation5], %s240
        %s242 = sand.u32 %s85, 1
        %s243 = smul.addr %s242, 64
        %s244 = scalar_lea.vmem [#allocation9], %s243
        // Predicated region
        $region45: #{tpu_custom_call.1} parent=35 // pred_check
          %p245 = pneg %p98
        $region46: #{tpu_custom_call.1} parent=35 // pred_check_branch
          %247 = sbr.rel (%p245) target = $region48
        $region47: #{tpu_custom_call.1} parent=35 // pred_region
          %248 = dma.done %s241, 1024
        $region48: #{tpu_custom_call.1} parent=35 // pred_fallthru
          _
        %p249 = pneg %p46
        %p250 = pneg %p43
        %p251 = pneg %p72
        %p252 = pneg %p69
        %s253 = sand.u32 %s18, 1
        %s254 = scalar_lea.sflag [#allocation5], %s253
        %s255 = sand.u32 %s85, 1
        %s256 = smul.addr %s255, 64
        %s257 = scalar_lea.vmem [#allocation9], %s256
        %p258 = pneg %p98
        %p259 = pneg %p95
        %p260 = scmp.lt.s32.totalorder %s22, 2
        %s261 = scalar_select %p260, %s22, 2
        %s262 = scalar_lea.vmem %s3, %s261
        %p263 = pneg %p124
        %p264 = pneg %p121
        %p265 = pneg %p150
        %p266 = pneg %p147
        %s267 = smul.u32 16, %s23
        %p268 = scmp.lt.s32.totalorder %s22, 2
        %s269 = scalar_select %p268, %s22, 2
        %s270 = scalar_lea.vmem %s3, %s269
        %s271 = smul.u32 16, %s23
        %s273 = smul.u32 %s23, 128
        %v274 = vld [vmem:[#allocation7] sm:$0xf]
        %v275 = vld [vmem:[#allocation7 + $0x4] sm:$0xf]
        %v276 = vld [vmem:[#allocation7 + $0x8] sm:$0xf]
        %v277 = vld [vmem:[#allocation7 + $0xc] sm:$0xf]
        %v278 = vld [vmem:[#allocation7 + $0x10] sm:$0xf]
        %v279 = vld [vmem:[#allocation7 + $0x14] sm:$0xf]
        %v280 = vld [vmem:[#allocation7 + $0x18] sm:$0xf]
        %v281 = vld [vmem:[#allocation7 + $0x1c] sm:$0xf]
        %v282 = vld [vmem:[#allocation7 + $0x20] sm:$0xf]
        %v283 = vld [vmem:[#allocation7 + $0x24] sm:$0xf]
        %v284 = vld [vmem:[#allocation7 + $0x28] sm:$0xf]
        %v285 = vld [vmem:[#allocation7 + $0x2c] sm:$0xf]
        %v286 = vld [vmem:[#allocation7 + $0x30] sm:$0xf]
        %v287 = vld [vmem:[#allocation7 + $0x34] sm:$0xf]
        %v288 = vld [vmem:[#allocation7 + $0x38] sm:$0xf]
        %v289 = vld [vmem:[#allocation7 + $0x3c] sm:$0xf]
        %p290 = scmp.eq.s32.totalorder %s22, 0
        // Predicated region
        $region49: #{tpu_custom_call.1} parent=35 // pred_check
          %p291 = pneg %p290
        $region50: #{tpu_custom_call.1} parent=35 // pred_check_branch
          %293 = sbr.rel (%p291) target = $region52
        $region51: #{tpu_custom_call.1} parent=35 // pred_region
          %p294 = scmp.eq.s32.totalorder %s23, 0
          // Predicated region
          $region53: #{tpu_custom_call.1} parent=51 // pred_check
            %p295 = pneg %p294
          $region54: #{tpu_custom_call.1} parent=51 // pred_check_branch
            %297 = sbr.rel (%p295) target = $region56
          $region55: #{tpu_custom_call.1} parent=51 // pred_region
            %v298 = vld [vmem:[#allocation4] sm:$0xf]
            %v299 = vld [vmem:[#allocation4 + $0x4] sm:$0xf]
            %v300 = vld [vmem:[#allocation4 + $0x8] sm:$0xf]
            %v301 = vld [vmem:[#allocation4 + $0xc] sm:$0xf]
            %v302 = vld [vmem:[#allocation4 + $0x10] sm:$0xf]
            %v303 = vld [vmem:[#allocation4 + $0x14] sm:$0xf]
            %v304 = vld [vmem:[#allocation4 + $0x18] sm:$0xf]
            %v305 = vld [vmem:[#allocation4 + $0x1c] sm:$0xf]
            %v306 = vld [vmem:[#allocation4 + $0x20] sm:$0xf]
            %v307 = vld [vmem:[#allocation4 + $0x24] sm:$0xf]
            %v308 = vld [vmem:[#allocation4 + $0x28] sm:$0xf]
            %v309 = vld [vmem:[#allocation4 + $0x2c] sm:$0xf]
            %v310 = vld [vmem:[#allocation4 + $0x30] sm:$0xf]
            %v311 = vld [vmem:[#allocation4 + $0x34] sm:$0xf]
            %v312 = vld [vmem:[#allocation4 + $0x38] sm:$0xf]
            %v313 = vld [vmem:[#allocation4 + $0x3c] sm:$0xf]
            %v314 = vld [vmem:[%s244] sm:$0xf]
            %v315 = vld [vmem:[%s244 + $0x4] sm:$0xf]
            %v316 = vld [vmem:[%s244 + $0x8] sm:$0xf]
            %v317 = vld [vmem:[%s244 + $0xc] sm:$0xf]
            %v318 = vld [vmem:[%s244 + $0x10] sm:$0xf]
            %v319 = vld [vmem:[%s244 + $0x14] sm:$0xf]
            %v320 = vld [vmem:[%s244 + $0x18] sm:$0xf]
            %v321 = vld [vmem:[%s244 + $0x1c] sm:$0xf]
            %v322 = vld [vmem:[%s244 + $0x20] sm:$0xf]
            %v323 = vld [vmem:[%s244 + $0x24] sm:$0xf]
            %v324 = vld [vmem:[%s244 + $0x28] sm:$0xf]
            %v325 = vld [vmem:[%s244 + $0x2c] sm:$0xf]
            %v326 = vld [vmem:[%s244 + $0x30] sm:$0xf]
            %v327 = vld [vmem:[%s244 + $0x34] sm:$0xf]
            %v328 = vld [vmem:[%s244 + $0x38] sm:$0xf]
            %v329 = vld [vmem:[%s244 + $0x3c] sm:$0xf]
            %v346 = vunpack.c.l.b16 %v298
            %v347 = vunpack.c.l.b16 %v299
            %v348 = vunpack.c.l.b16 %v300
            %v349 = vunpack.c.l.b16 %v301
            %v350 = vunpack.c.l.b16 %v302
            %v351 = vunpack.c.l.b16 %v303
            %v352 = vunpack.c.l.b16 %v304
            %v353 = vunpack.c.l.b16 %v305
            %v354 = vunpack.c.l.b16 %v306
            %v355 = vunpack.c.l.b16 %v307
            %v356 = vunpack.c.l.b16 %v308
            %v357 = vunpack.c.l.b16 %v309
            %v358 = vunpack.c.l.b16 %v310
            %v359 = vunpack.c.l.b16 %v311
            %v360 = vunpack.c.l.b16 %v312
            %v361 = vunpack.c.l.b16 %v313
            %v362 = vpack.c.b16 %v347, %v346
            %v363 = vpack.c.b16 %v349, %v348
            %v364 = vpack.c.b16 %v351, %v350
            %v365 = vpack.c.b16 %v353, %v352
            %v366 = vpack.c.b16 %v355, %v354
            %v367 = vpack.c.b16 %v357, %v356
            %v368 = vpack.c.b16 %v359, %v358
            %v369 = vpack.c.b16 %v361, %v360
            %v394 = vunpack.c.l.b16 %v314
            %v395 = vunpack.c.l.b16 %v315
            %v396 = vunpack.c.l.b16 %v316
            %v397 = vunpack.c.l.b16 %v317
            %v398 = vunpack.c.l.b16 %v318
            %v399 = vunpack.c.l.b16 %v319
            %v400 = vunpack.c.l.b16 %v320
            %v401 = vunpack.c.l.b16 %v321
            %v402 = vunpack.c.l.b16 %v322
            %v403 = vunpack.c.l.b16 %v323
            %v404 = vunpack.c.l.b16 %v324
            %v405 = vunpack.c.l.b16 %v325
            %v406 = vunpack.c.l.b16 %v326
            %v407 = vunpack.c.l.b16 %v327
            %v408 = vunpack.c.l.b16 %v328
            %v409 = vunpack.c.l.b16 %v329
            %v410 = vpack.c.b16 %v395, %v394
            %v411 = vpack.c.b16 %v397, %v396
            %v412 = vpack.c.b16 %v399, %v398
            %v413 = vpack.c.b16 %v401, %v400
            %v414 = vpack.c.b16 %v403, %v402
            %v415 = vpack.c.b16 %v405, %v404
            %v416 = vpack.c.b16 %v407, %v406
            %v417 = vpack.c.b16 %v409, %v408
            %426 = vmatprep.subr.bf16.mxu0 0
            %427 = vmatpush1.bf16.msra.mxu0 %v417
            %428 = vmatprep.subr.bf16.mxu0 0
            %429 = vmatpush1.bf16.msra.mxu0 %v416
            %430 = vmatprep.subr.bf16.mxu0 0
            %431 = vmatpush1.bf16.msra.mxu0 %v415
            %432 = vmatprep.subr.bf16.mxu0 0
            %433 = vmatpush1.bf16.msra.mxu0 %v414
            %434 = vmatprep.subr.bf16.mxu0 0
            %435 = vmatpush1.bf16.msra.mxu0 %v413
            %436 = vmatprep.subr.bf16.mxu0 0
            %437 = vmatpush1.bf16.msra.mxu0 %v412
            %438 = vmatprep.subr.bf16.mxu0 0
            %439 = vmatpush1.bf16.msra.mxu0 %v411
            %440 = vmatprep.subr.bf16.mxu0 0
            %441 = vmatpush1.bf16.msra.mxu0 %v410
            %442 = vmatprep.subr.bf16.mxu0 0
            %443 = vmatpush2.bf16.msra.mxu0 0
            %444 = vmatprep.subr.bf16.mxu0 0
            %445 = vmatpush2.bf16.msra.mxu0 0
            %446 = vmatprep.subr.bf16.mxu0 0
            %447 = vmatpush2.bf16.msra.mxu0 0
            %448 = vmatprep.subr.bf16.mxu0 0
            %449 = vmatpush2.bf16.msra.mxu0 0
            %450 = vmatprep.subr.bf16.mxu0 0
            %451 = vmatpush2.bf16.msra.mxu0 0
            %452 = vmatprep.subr.bf16.mxu0 0
            %453 = vmatpush2.bf16.msra.mxu0 0
            %454 = vmatprep.subr.bf16.mxu0 0
            %455 = vmatpush2.bf16.msra.mxu0 0
            %456 = vmatprep.subr.bf16.mxu0 0
            %457 = vmatpush2.bf16.msra.mxu0 0
            %458 = vmatprep.mubr.bf16.mxu0 0
            %459 = vmatmul.mubr.bf16.gmra.mxu0 %v362
            %v460 = vpop.f32.mrf.mxu0
            %v461 = vadd.f32 0.0, %v460
            %v462 = vpop.f32.mrf.mxu0
            %v463 = vpop.f32.mrf.mxu0
            %v464 = vadd.f32 0.0, %v463
            %v465 = vpop.f32.mrf.mxu0
            %466 = vmatprep.mubr.bf16.mxu0 0
            %467 = vmatmul.mubr.bf16.gmra.mxu0 %v363
            %v468 = vpop.f32.mrf.mxu0
            %v469 = vadd.f32 0.0, %v468
            %v470 = vpop.f32.mrf.mxu0
            %v471 = vpop.f32.mrf.mxu0
            %v472 = vadd.f32 0.0, %v471
            %v473 = vpop.f32.mrf.mxu0
            %474 = vmatprep.mubr.bf16.mxu0 0
            %475 = vmatmul.mubr.bf16.gmra.mxu0 %v364
            %v476 = vpop.f32.mrf.mxu0
            %v477 = vadd.f32 0.0, %v476
            %v478 = vpop.f32.mrf.mxu0
            %v479 = vpop.f32.mrf.mxu0
            %v480 = vadd.f32 0.0, %v479
            %v481 = vpop.f32.mrf.mxu0
            %482 = vmatprep.mubr.bf16.mxu0 0
            %483 = vmatmul.mubr.bf16.gmra.mxu0 %v365
            %v484 = vpop.f32.mrf.mxu0
            %v485 = vadd.f32 0.0, %v484
            %v486 = vpop.f32.mrf.mxu0
            %v487 = vpop.f32.mrf.mxu0
            %v488 = vadd.f32 0.0, %v487
            %v489 = vpop.f32.mrf.mxu0
            %490 = vmatprep.mubr.bf16.mxu0 0
            %491 = vmatmul.mubr.bf16.gmra.mxu0 %v366
            %v492 = vpop.f32.mrf.mxu0
            %v493 = vadd.f32 0.0, %v492
            %v494 = vpop.f32.mrf.mxu0
            %v495 = vpop.f32.mrf.mxu0
            %v496 = vadd.f32 0.0, %v495
            %v497 = vpop.f32.mrf.mxu0
            %498 = vmatprep.mubr.bf16.mxu0 0
            %499 = vmatmul.mubr.bf16.gmra.mxu0 %v367
            %v500 = vpop.f32.mrf.mxu0
            %v501 = vadd.f32 0.0, %v500
            %v502 = vpop.f32.mrf.mxu0
            %v503 = vpop.f32.mrf.mxu0
            %v504 = vadd.f32 0.0, %v503
            %v505 = vpop.f32.mrf.mxu0
            %506 = vmatprep.mubr.bf16.mxu0 0
            %507 = vmatmul.mubr.bf16.gmra.mxu0 %v368
            %v508 = vpop.f32.mrf.mxu0
            %v509 = vadd.f32 0.0, %v508
            %v510 = vpop.f32.mrf.mxu0
            %v511 = vpop.f32.mrf.mxu0
            %v512 = vadd.f32 0.0, %v511
            %v513 = vpop.f32.mrf.mxu0
            %514 = vmatprep.mubr.bf16.mxu0 0
            %515 = vmatmul.mubr.bf16.gmra.mxu0 %v369
            %v516 = vpop.f32.mrf.mxu0
            %v517 = vadd.f32 0.0, %v516
            %v518 = vpop.f32.mrf.mxu0
            %v519 = vpop.f32.mrf.mxu0
            %v520 = vadd.f32 0.0, %v519
            %v521 = vpop.f32.mrf.mxu0
            %522 = vdwg.mxu0
            %v523 = vpack.c.bf16 %v464, %v461
            %v524 = vpack.c.bf16 %v472, %v469
            %v525 = vpack.c.bf16 %v480, %v477
            %v526 = vpack.c.bf16 %v488, %v485
            %v527 = vpack.c.bf16 %v496, %v493
            %v528 = vpack.c.bf16 %v504, %v501
            %v529 = vpack.c.bf16 %v512, %v509
            %v530 = vpack.c.bf16 %v520, %v517
            %v539 = vunpack.c.l.b16 %v523
            %v540 = vunpack.c.h.b16 %v523
            %v541 = vunpack.c.l.b16 %v524
            %v542 = vunpack.c.h.b16 %v524
            %v543 = vunpack.c.l.b16 %v525
            %v544 = vunpack.c.h.b16 %v525
            %v545 = vunpack.c.l.b16 %v526
            %v546 = vunpack.c.h.b16 %v526
            %v547 = vunpack.c.l.b16 %v527
            %v548 = vunpack.c.h.b16 %v527
            %v549 = vunpack.c.l.b16 %v528
            %v550 = vunpack.c.h.b16 %v528
            %v551 = vunpack.c.l.b16 %v529
            %v552 = vunpack.c.h.b16 %v529
            %v553 = vunpack.c.l.b16 %v530
            %v554 = vunpack.c.h.b16 %v530
            %v555 = vpack.c.b16 %v539, %v539
            %v556 = vpack.c.b16 %v540, %v540
            %v557 = vpack.c.b16 %v541, %v541
            %v558 = vpack.c.b16 %v542, %v542
            %v559 = vpack.c.b16 %v543, %v543
            %v560 = vpack.c.b16 %v544, %v544
            %v561 = vpack.c.b16 %v545, %v545
            %v562 = vpack.c.b16 %v546, %v546
            %v563 = vpack.c.b16 %v547, %v547
            %v564 = vpack.c.b16 %v548, %v548
            %v565 = vpack.c.b16 %v549, %v549
            %v566 = vpack.c.b16 %v550, %v550
            %v567 = vpack.c.b16 %v551, %v551
            %v568 = vpack.c.b16 %v552, %v552
            %v569 = vpack.c.b16 %v553, %v553
            %v570 = vpack.c.b16 %v554, %v554
            %587 = vst [vmem:[#allocation3] sm:$0xf] %v555
            %588 = vst [vmem:[#allocation3 + $0x4] sm:$0xf] %v556
            %589 = vst [vmem:[#allocation3 + $0x8] sm:$0xf] %v557
            %590 = vst [vmem:[#allocation3 + $0xc] sm:$0xf] %v558
            %591 = vst [vmem:[#allocation3 + $0x10] sm:$0xf] %v559
            %592 = vst [vmem:[#allocation3 + $0x14] sm:$0xf] %v560
            %593 = vst [vmem:[#allocation3 + $0x18] sm:$0xf] %v561
            %594 = vst [vmem:[#allocation3 + $0x1c] sm:$0xf] %v562
            %595 = vst [vmem:[#allocation3 + $0x20] sm:$0xf] %v563
            %596 = vst [vmem:[#allocation3 + $0x24] sm:$0xf] %v564
            %597 = vst [vmem:[#allocation3 + $0x28] sm:$0xf] %v565
            %598 = vst [vmem:[#allocation3 + $0x2c] sm:$0xf] %v566
            %599 = vst [vmem:[#allocation3 + $0x30] sm:$0xf] %v567
            %600 = vst [vmem:[#allocation3 + $0x34] sm:$0xf] %v568
            %601 = vst [vmem:[#allocation3 + $0x38] sm:$0xf] %v569
            %602 = vst [vmem:[#allocation3 + $0x3c] sm:$0xf] %v570
          $region56: #{tpu_custom_call.1} parent=51 // pred_fallthru
            _
          %v603 = vld [vmem:[#allocation3] sm:$0xf]
          %v604 = vld [vmem:[#allocation3 + $0x4] sm:$0xf]
          %v605 = vld [vmem:[#allocation3 + $0x8] sm:$0xf]
          %v606 = vld [vmem:[#allocation3 + $0xc] sm:$0xf]
          %v607 = vld [vmem:[#allocation3 + $0x10] sm:$0xf]
          %v608 = vld [vmem:[#allocation3 + $0x14] sm:$0xf]
          %v609 = vld [vmem:[#allocation3 + $0x18] sm:$0xf]
          %v610 = vld [vmem:[#allocation3 + $0x1c] sm:$0xf]
          %v611 = vld [vmem:[#allocation3 + $0x20] sm:$0xf]
          %v612 = vld [vmem:[#allocation3 + $0x24] sm:$0xf]
          %v613 = vld [vmem:[#allocation3 + $0x28] sm:$0xf]
          %v614 = vld [vmem:[#allocation3 + $0x2c] sm:$0xf]
          %v615 = vld [vmem:[#allocation3 + $0x30] sm:$0xf]
          %v616 = vld [vmem:[#allocation3 + $0x34] sm:$0xf]
          %v617 = vld [vmem:[#allocation3 + $0x38] sm:$0xf]
          %v618 = vld [vmem:[#allocation3 + $0x3c] sm:$0xf]
          %v619 = vld [vmem:[%s270] sm:$0x1]
          %v621 = vlaneseq
          %v622 = vshrl.u32 %v621, 7
          %v623 = vsub.s32 0, %v622
          %v624 = vrot.slane %v619, %v623
          %v642 = vunpack.c.l.b16 %v274
          %v643 = vunpack.c.l.b16 %v275
          %v644 = vunpack.c.l.b16 %v276
          %v645 = vunpack.c.l.b16 %v277
          %v646 = vunpack.c.l.b16 %v278
          %v647 = vunpack.c.l.b16 %v279
          %v648 = vunpack.c.l.b16 %v280
          %v649 = vunpack.c.l.b16 %v281
          %v650 = vunpack.c.l.b16 %v282
          %v651 = vunpack.c.l.b16 %v283
          %v652 = vunpack.c.l.b16 %v284
          %v653 = vunpack.c.l.b16 %v285
          %v654 = vunpack.c.l.b16 %v286
          %v655 = vunpack.c.l.b16 %v287
          %v656 = vunpack.c.l.b16 %v288
          %v657 = vunpack.c.l.b16 %v289
          %v658 = vpack.c.b16 %v643, %v642
          %v659 = vpack.c.b16 %v645, %v644
          %v660 = vpack.c.b16 %v647, %v646
          %v661 = vpack.c.b16 %v649, %v648
          %v662 = vpack.c.b16 %v651, %v650
          %v663 = vpack.c.b16 %v653, %v652
          %v664 = vpack.c.b16 %v655, %v654
          %v665 = vpack.c.b16 %v657, %v656
          %v690 = vunpack.c.l.b16 %v603
          %v691 = vunpack.c.l.b16 %v604
          %v692 = vunpack.c.l.b16 %v605
          %v693 = vunpack.c.l.b16 %v606
          %v694 = vunpack.c.l.b16 %v607
          %v695 = vunpack.c.l.b16 %v608
          %v696 = vunpack.c.l.b16 %v609
          %v697 = vunpack.c.l.b16 %v610
          %v698 = vunpack.c.l.b16 %v611
          %v699 = vunpack.c.l.b16 %v612
          %v700 = vunpack.c.l.b16 %v613
          %v701 = vunpack.c.l.b16 %v614
          %v702 = vunpack.c.l.b16 %v615
          %v703 = vunpack.c.l.b16 %v616
          %v704 = vunpack.c.l.b16 %v617
          %v705 = vunpack.c.l.b16 %v618
          %v706 = vpack.c.b16 %v691, %v690
          %v707 = vpack.c.b16 %v693, %v692
          %v708 = vpack.c.b16 %v695, %v694
          %v709 = vpack.c.b16 %v697, %v696
          %v710 = vpack.c.b16 %v699, %v698
          %v711 = vpack.c.b16 %v701, %v700
          %v712 = vpack.c.b16 %v703, %v702
          %v713 = vpack.c.b16 %v705, %v704
          %722 = vmatprep.subr.bf16.mxu0 0
          %723 = vmatpush1.bf16.msra.mxu0 %v713
          %724 = vmatprep.subr.bf16.mxu0 0
          %725 = vmatpush1.bf16.msra.mxu0 %v712
          %726 = vmatprep.subr.bf16.mxu0 0
          %727 = vmatpush1.bf16.msra.mxu0 %v711
          %728 = vmatprep.subr.bf16.mxu0 0
          %729 = vmatpush1.bf16.msra.mxu0 %v710
          %730 = vmatprep.subr.bf16.mxu0 0
          %731 = vmatpush1.bf16.msra.mxu0 %v709
          %732 = vmatprep.subr.bf16.mxu0 0
          %733 = vmatpush1.bf16.msra.mxu0 %v708
          %734 = vmatprep.subr.bf16.mxu0 0
          %735 = vmatpush1.bf16.msra.mxu0 %v707
          %736 = vmatprep.subr.bf16.mxu0 0
          %737 = vmatpush1.bf16.msra.mxu0 %v706
          %738 = vmatprep.subr.bf16.mxu0 0
          %739 = vmatpush2.bf16.msra.mxu0 0
          %740 = vmatprep.subr.bf16.mxu0 0
          %741 = vmatpush2.bf16.msra.mxu0 0
          %742 = vmatprep.subr.bf16.mxu0 0
          %743 = vmatpush2.bf16.msra.mxu0 0
          %744 = vmatprep.subr.bf16.mxu0 0
          %745 = vmatpush2.bf16.msra.mxu0 0
          %746 = vmatprep.subr.bf16.mxu0 0
          %747 = vmatpush2.bf16.msra.mxu0 0
          %748 = vmatprep.subr.bf16.mxu0 0
          %749 = vmatpush2.bf16.msra.mxu0 0
          %750 = vmatprep.subr.bf16.mxu0 0
          %751 = vmatpush2.bf16.msra.mxu0 0
          %752 = vmatprep.subr.bf16.mxu0 0
          %753 = vmatpush2.bf16.msra.mxu0 0
          %754 = vmatprep.mubr.bf16.mxu0 0
          %755 = vmatmul.mubr.bf16.gmra.mxu0 %v658
          %v756 = vpop.f32.mrf.mxu0
          %v757 = vadd.f32 %v624, %v756
          %v758 = vpop.f32.mrf.mxu0
          %v759 = vpop.f32.mrf.mxu0
          %v760 = vadd.f32 %v624, %v759
          %v761 = vpop.f32.mrf.mxu0
          %762 = vmatprep.mubr.bf16.mxu0 0
          %763 = vmatmul.mubr.bf16.gmra.mxu0 %v659
          %v764 = vpop.f32.mrf.mxu0
          %v765 = vadd.f32 %v624, %v764
          %v766 = vpop.f32.mrf.mxu0
          %v767 = vpop.f32.mrf.mxu0
          %v768 = vadd.f32 %v624, %v767
          %v769 = vpop.f32.mrf.mxu0
          %770 = vmatprep.mubr.bf16.mxu0 0
          %771 = vmatmul.mubr.bf16.gmra.mxu0 %v660
          %v772 = vpop.f32.mrf.mxu0
          %v773 = vadd.f32 %v624, %v772
          %v774 = vpop.f32.mrf.mxu0
          %v775 = vpop.f32.mrf.mxu0
          %v776 = vadd.f32 %v624, %v775
          %v777 = vpop.f32.mrf.mxu0
          %778 = vmatprep.mubr.bf16.mxu0 0
          %779 = vmatmul.mubr.bf16.gmra.mxu0 %v661
          %v780 = vpop.f32.mrf.mxu0
          %v781 = vadd.f32 %v624, %v780
          %v782 = vpop.f32.mrf.mxu0
          %v783 = vpop.f32.mrf.mxu0
          %v784 = vadd.f32 %v624, %v783
          %v785 = vpop.f32.mrf.mxu0
          %786 = vmatprep.mubr.bf16.mxu0 0
          %787 = vmatmul.mubr.bf16.gmra.mxu0 %v662
          %v788 = vpop.f32.mrf.mxu0
          %v789 = vadd.f32 %v624, %v788
          %v790 = vpop.f32.mrf.mxu0
          %v791 = vpop.f32.mrf.mxu0
          %v792 = vadd.f32 %v624, %v791
          %v793 = vpop.f32.mrf.mxu0
          %794 = vmatprep.mubr.bf16.mxu0 0
          %795 = vmatmul.mubr.bf16.gmra.mxu0 %v663
          %v796 = vpop.f32.mrf.mxu0
          %v797 = vadd.f32 %v624, %v796
          %v798 = vpop.f32.mrf.mxu0
          %v799 = vpop.f32.mrf.mxu0
          %v800 = vadd.f32 %v624, %v799
          %v801 = vpop.f32.mrf.mxu0
          %802 = vmatprep.mubr.bf16.mxu0 0
          %803 = vmatmul.mubr.bf16.gmra.mxu0 %v664
          %v804 = vpop.f32.mrf.mxu0
          %v805 = vadd.f32 %v624, %v804
          %v806 = vpop.f32.mrf.mxu0
          %v807 = vpop.f32.mrf.mxu0
          %v808 = vadd.f32 %v624, %v807
          %v809 = vpop.f32.mrf.mxu0
          %810 = vmatprep.mubr.bf16.mxu0 0
          %811 = vmatmul.mubr.bf16.gmra.mxu0 %v665
          %v812 = vpop.f32.mrf.mxu0
          %v813 = vadd.f32 %v624, %v812
          %v814 = vpop.f32.mrf.mxu0
          %v815 = vpop.f32.mrf.mxu0
          %v816 = vadd.f32 %v624, %v815
          %v817 = vpop.f32.mrf.mxu0
          %818 = vdwg.mxu0
          %v819 = vmax.f32 %v757, 0.0
          %v820 = vmax.f32 %v760, 0.0
          %v821 = vmax.f32 %v765, 0.0
          %v822 = vmax.f32 %v768, 0.0
          %v823 = vmax.f32 %v773, 0.0
          %v824 = vmax.f32 %v776, 0.0
          %v825 = vmax.f32 %v781, 0.0
          %v826 = vmax.f32 %v784, 0.0
          %v827 = vmax.f32 %v789, 0.0
          %v828 = vmax.f32 %v792, 0.0
          %v829 = vmax.f32 %v797, 0.0
          %v830 = vmax.f32 %v800, 0.0
          %v831 = vmax.f32 %v805, 0.0
          %v832 = vmax.f32 %v808, 0.0
          %v833 = vmax.f32 %v813, 0.0
          %v834 = vmax.f32 %v816, 0.0
          %v835 = vpack.c.bf16 %v820, %v819
          %v836 = vpack.c.bf16 %v822, %v821
          %v837 = vpack.c.bf16 %v824, %v823
          %v838 = vpack.c.bf16 %v826, %v825
          %v839 = vpack.c.bf16 %v828, %v827
          %v840 = vpack.c.bf16 %v830, %v829
          %v841 = vpack.c.bf16 %v832, %v831
          %v842 = vpack.c.bf16 %v834, %v833
          %v851 = vunpack.c.l.b16 %v835
          %v852 = vunpack.c.h.b16 %v835
          %v853 = vunpack.c.l.b16 %v836
          %v854 = vunpack.c.h.b16 %v836
          %v855 = vunpack.c.l.b16 %v837
          %v856 = vunpack.c.h.b16 %v837
          %v857 = vunpack.c.l.b16 %v838
          %v858 = vunpack.c.h.b16 %v838
          %v859 = vunpack.c.l.b16 %v839
          %v860 = vunpack.c.h.b16 %v839
          %v861 = vunpack.c.l.b16 %v840
          %v862 = vunpack.c.h.b16 %v840
          %v863 = vunpack.c.l.b16 %v841
          %v864 = vunpack.c.h.b16 %v841
          %v865 = vunpack.c.l.b16 %v842
          %v866 = vunpack.c.h.b16 %v842
          %v867 = vpack.c.b16 %v851, %v851
          %v868 = vpack.c.b16 %v852, %v852
          %v869 = vpack.c.b16 %v853, %v853
          %v870 = vpack.c.b16 %v854, %v854
          %v871 = vpack.c.b16 %v855, %v855
          %v872 = vpack.c.b16 %v856, %v856
          %v873 = vpack.c.b16 %v857, %v857
          %v874 = vpack.c.b16 %v858, %v858
          %v875 = vpack.c.b16 %v859, %v859
          %v876 = vpack.c.b16 %v860, %v860
          %v877 = vpack.c.b16 %v861, %v861
          %v878 = vpack.c.b16 %v862, %v862
          %v879 = vpack.c.b16 %v863, %v863
          %v880 = vpack.c.b16 %v864, %v864
          %v881 = vpack.c.b16 %v865, %v865
          %v882 = vpack.c.b16 %v866, %v866
          %s899 = sshra.s32 %s273, 3
          %s900 = sand.u32 %s273, 7
          %s901 = smul.addr %s899, 4
          %s902 = scalar_lea.vmem [#allocation2], %s901
          %903 = vst [vmem:[%s902] sm:$0xf] %v867
          %904 = vst [vmem:[%s902 + $0x4] sm:$0xf] %v868
          %905 = vst [vmem:[%s902 + $0x8] sm:$0xf] %v869
          %906 = vst [vmem:[%s902 + $0xc] sm:$0xf] %v870
          %907 = vst [vmem:[%s902 + $0x10] sm:$0xf] %v871
          %908 = vst [vmem:[%s902 + $0x14] sm:$0xf] %v872
          %909 = vst [vmem:[%s902 + $0x18] sm:$0xf] %v873
          %910 = vst [vmem:[%s902 + $0x1c] sm:$0xf] %v874
          %911 = vst [vmem:[%s902 + $0x20] sm:$0xf] %v875
          %912 = vst [vmem:[%s902 + $0x24] sm:$0xf] %v876
          %913 = vst [vmem:[%s902 + $0x28] sm:$0xf] %v877
          %914 = vst [vmem:[%s902 + $0x2c] sm:$0xf] %v878
          %915 = vst [vmem:[%s902 + $0x30] sm:$0xf] %v879
          %916 = vst [vmem:[%s902 + $0x34] sm:$0xf] %v880
          %917 = vst [vmem:[%s902 + $0x38] sm:$0xf] %v881
          %918 = vst [vmem:[%s902 + $0x3c] sm:$0xf] %v882
        $region52: #{tpu_custom_call.1} parent=35 // pred_fallthru
          _
        %p919 = scmp.eq.s32.totalorder %s22, 1
        // Predicated region
        $region57: #{tpu_custom_call.1} parent=35 // pred_check
          %p920 = pneg %p919
        $region58: #{tpu_custom_call.1} parent=35 // pred_check_branch
          %922 = sbr.rel (%p920) target = $region60
        $region59: #{tpu_custom_call.1} parent=35 // pred_region
          %p923 = scmp.eq.s32.totalorder %s23, 0
          // Predicated region
          $region61: #{tpu_custom_call.1} parent=59 // pred_check
            %p924 = pneg %p923
          $region62: #{tpu_custom_call.1} parent=59 // pred_check_branch
            %926 = sbr.rel (%p924) target = $region64
          $region63: #{tpu_custom_call.1} parent=59 // pred_region
            %v927 = vld [vmem:[#allocation2] sm:$0xf]
            %v928 = vld [vmem:[#allocation2 + $0x4] sm:$0xf]
            %v929 = vld [vmem:[#allocation2 + $0x8] sm:$0xf]
            %v930 = vld [vmem:[#allocation2 + $0xc] sm:$0xf]
            %v931 = vld [vmem:[#allocation2 + $0x10] sm:$0xf]
            %v932 = vld [vmem:[#allocation2 + $0x14] sm:$0xf]
            %v933 = vld [vmem:[#allocation2 + $0x18] sm:$0xf]
            %v934 = vld [vmem:[#allocation2 + $0x1c] sm:$0xf]
            %v935 = vld [vmem:[#allocation2 + $0x20] sm:$0xf]
            %v936 = vld [vmem:[#allocation2 + $0x24] sm:$0xf]
            %v937 = vld [vmem:[#allocation2 + $0x28] sm:$0xf]
            %v938 = vld [vmem:[#allocation2 + $0x2c] sm:$0xf]
            %v939 = vld [vmem:[#allocation2 + $0x30] sm:$0xf]
            %v940 = vld [vmem:[#allocation2 + $0x34] sm:$0xf]
            %v941 = vld [vmem:[#allocation2 + $0x38] sm:$0xf]
            %v942 = vld [vmem:[#allocation2 + $0x3c] sm:$0xf]
            %v943 = vld [vmem:[%s244] sm:$0xf]
            %v944 = vld [vmem:[%s244 + $0x4] sm:$0xf]
            %v945 = vld [vmem:[%s244 + $0x8] sm:$0xf]
            %v946 = vld [vmem:[%s244 + $0xc] sm:$0xf]
            %v947 = vld [vmem:[%s244 + $0x10] sm:$0xf]
            %v948 = vld [vmem:[%s244 + $0x14] sm:$0xf]
            %v949 = vld [vmem:[%s244 + $0x18] sm:$0xf]
            %v950 = vld [vmem:[%s244 + $0x1c] sm:$0xf]
            %v951 = vld [vmem:[%s244 + $0x20] sm:$0xf]
            %v952 = vld [vmem:[%s244 + $0x24] sm:$0xf]
            %v953 = vld [vmem:[%s244 + $0x28] sm:$0xf]
            %v954 = vld [vmem:[%s244 + $0x2c] sm:$0xf]
            %v955 = vld [vmem:[%s244 + $0x30] sm:$0xf]
            %v956 = vld [vmem:[%s244 + $0x34] sm:$0xf]
            %v957 = vld [vmem:[%s244 + $0x38] sm:$0xf]
            %v958 = vld [vmem:[%s244 + $0x3c] sm:$0xf]
            %v975 = vunpack.c.l.b16 %v927
            %v976 = vunpack.c.l.b16 %v928
            %v977 = vunpack.c.l.b16 %v929
            %v978 = vunpack.c.l.b16 %v930
            %v979 = vunpack.c.l.b16 %v931
            %v980 = vunpack.c.l.b16 %v932
            %v981 = vunpack.c.l.b16 %v933
            %v982 = vunpack.c.l.b16 %v934
            %v983 = vunpack.c.l.b16 %v935
            %v984 = vunpack.c.l.b16 %v936
            %v985 = vunpack.c.l.b16 %v937
            %v986 = vunpack.c.l.b16 %v938
            %v987 = vunpack.c.l.b16 %v939
            %v988 = vunpack.c.l.b16 %v940
            %v989 = vunpack.c.l.b16 %v941
            %v990 = vunpack.c.l.b16 %v942
            %v991 = vpack.c.b16 %v976, %v975
            %v992 = vpack.c.b16 %v978, %v977
            %v993 = vpack.c.b16 %v980, %v979
            %v994 = vpack.c.b16 %v982, %v981
            %v995 = vpack.c.b16 %v984, %v983
            %v996 = vpack.c.b16 %v986, %v985
            %v997 = vpack.c.b16 %v988, %v987
            %v998 = vpack.c.b16 %v990, %v989
            %v1023 = vunpack.c.l.b16 %v943
            %v1024 = vunpack.c.l.b16 %v944
            %v1025 = vunpack.c.l.b16 %v945
            %v1026 = vunpack.c.l.b16 %v946
            %v1027 = vunpack.c.l.b16 %v947
            %v1028 = vunpack.c.l.b16 %v948
            %v1029 = vunpack.c.l.b16 %v949
            %v1030 = vunpack.c.l.b16 %v950
            %v1031 = vunpack.c.l.b16 %v951
            %v1032 = vunpack.c.l.b16 %v952
            %v1033 = vunpack.c.l.b16 %v953
            %v1034 = vunpack.c.l.b16 %v954
            %v1035 = vunpack.c.l.b16 %v955
            %v1036 = vunpack.c.l.b16 %v956
            %v1037 = vunpack.c.l.b16 %v957
            %v1038 = vunpack.c.l.b16 %v958
            %v1039 = vpack.c.b16 %v1024, %v1023
            %v1040 = vpack.c.b16 %v1026, %v1025
            %v1041 = vpack.c.b16 %v1028, %v1027
            %v1042 = vpack.c.b16 %v1030, %v1029
            %v1043 = vpack.c.b16 %v1032, %v1031
            %v1044 = vpack.c.b16 %v1034, %v1033
            %v1045 = vpack.c.b16 %v1036, %v1035
            %v1046 = vpack.c.b16 %v1038, %v1037
            %1055 = vmatprep.subr.bf16.mxu0 0
            %1056 = vmatpush1.bf16.msra.mxu0 %v1046
            %1057 = vmatprep.subr.bf16.mxu0 0
            %1058 = vmatpush1.bf16.msra.mxu0 %v1045
            %1059 = vmatprep.subr.bf16.mxu0 0
            %1060 = vmatpush1.bf16.msra.mxu0 %v1044
            %1061 = vmatprep.subr.bf16.mxu0 0
            %1062 = vmatpush1.bf16.msra.mxu0 %v1043
            %1063 = vmatprep.subr.bf16.mxu0 0
            %1064 = vmatpush1.bf16.msra.mxu0 %v1042
            %1065 = vmatprep.subr.bf16.mxu0 0
            %1066 = vmatpush1.bf16.msra.mxu0 %v1041
            %1067 = vmatprep.subr.bf16.mxu0 0
            %1068 = vmatpush1.bf16.msra.mxu0 %v1040
            %1069 = vmatprep.subr.bf16.mxu0 0
            %1070 = vmatpush1.bf16.msra.mxu0 %v1039
            %1071 = vmatprep.subr.bf16.mxu0 0
            %1072 = vmatpush2.bf16.msra.mxu0 0
            %1073 = vmatprep.subr.bf16.mxu0 0
            %1074 = vmatpush2.bf16.msra.mxu0 0
            %1075 = vmatprep.subr.bf16.mxu0 0
            %1076 = vmatpush2.bf16.msra.mxu0 0
            %1077 = vmatprep.subr.bf16.mxu0 0
            %1078 = vmatpush2.bf16.msra.mxu0 0
            %1079 = vmatprep.subr.bf16.mxu0 0
            %1080 = vmatpush2.bf16.msra.mxu0 0
            %1081 = vmatprep.subr.bf16.mxu0 0
            %1082 = vmatpush2.bf16.msra.mxu0 0
            %1083 = vmatprep.subr.bf16.mxu0 0
            %1084 = vmatpush2.bf16.msra.mxu0 0
            %1085 = vmatprep.subr.bf16.mxu0 0
            %1086 = vmatpush2.bf16.msra.mxu0 0
            %1087 = vmatprep.mubr.bf16.mxu0 0
            %1088 = vmatmul.mubr.bf16.gmra.mxu0 %v991
            %v1089 = vpop.f32.mrf.mxu0
            %v1090 = vadd.f32 0.0, %v1089
            %v1091 = vpop.f32.mrf.mxu0
            %v1092 = vpop.f32.mrf.mxu0
            %v1093 = vadd.f32 0.0, %v1092
            %v1094 = vpop.f32.mrf.mxu0
            %1095 = vmatprep.mubr.bf16.mxu0 0
            %1096 = vmatmul.mubr.bf16.gmra.mxu0 %v992
            %v1097 = vpop.f32.mrf.mxu0
            %v1098 = vadd.f32 0.0, %v1097
            %v1099 = vpop.f32.mrf.mxu0
            %v1100 = vpop.f32.mrf.mxu0
            %v1101 = vadd.f32 0.0, %v1100
            %v1102 = vpop.f32.mrf.mxu0
            %1103 = vmatprep.mubr.bf16.mxu0 0
            %1104 = vmatmul.mubr.bf16.gmra.mxu0 %v993
            %v1105 = vpop.f32.mrf.mxu0
            %v1106 = vadd.f32 0.0, %v1105
            %v1107 = vpop.f32.mrf.mxu0
            %v1108 = vpop.f32.mrf.mxu0
            %v1109 = vadd.f32 0.0, %v1108
            %v1110 = vpop.f32.mrf.mxu0
            %1111 = vmatprep.mubr.bf16.mxu0 0
            %1112 = vmatmul.mubr.bf16.gmra.mxu0 %v994
            %v1113 = vpop.f32.mrf.mxu0
            %v1114 = vadd.f32 0.0, %v1113
            %v1115 = vpop.f32.mrf.mxu0
            %v1116 = vpop.f32.mrf.mxu0
            %v1117 = vadd.f32 0.0, %v1116
            %v1118 = vpop.f32.mrf.mxu0
            %1119 = vmatprep.mubr.bf16.mxu0 0
            %1120 = vmatmul.mubr.bf16.gmra.mxu0 %v995
            %v1121 = vpop.f32.mrf.mxu0
            %v1122 = vadd.f32 0.0, %v1121
            %v1123 = vpop.f32.mrf.mxu0
            %v1124 = vpop.f32.mrf.mxu0
            %v1125 = vadd.f32 0.0, %v1124
            %v1126 = vpop.f32.mrf.mxu0
            %1127 = vmatprep.mubr.bf16.mxu0 0
            %1128 = vmatmul.mubr.bf16.gmra.mxu0 %v996
            %v1129 = vpop.f32.mrf.mxu0
            %v1130 = vadd.f32 0.0, %v1129
            %v1131 = vpop.f32.mrf.mxu0
            %v1132 = vpop.f32.mrf.mxu0
            %v1133 = vadd.f32 0.0, %v1132
            %v1134 = vpop.f32.mrf.mxu0
            %1135 = vmatprep.mubr.bf16.mxu0 0
            %1136 = vmatmul.mubr.bf16.gmra.mxu0 %v997
            %v1137 = vpop.f32.mrf.mxu0
            %v1138 = vadd.f32 0.0, %v1137
            %v1139 = vpop.f32.mrf.mxu0
            %v1140 = vpop.f32.mrf.mxu0
            %v1141 = vadd.f32 0.0, %v1140
            %v1142 = vpop.f32.mrf.mxu0
            %1143 = vmatprep.mubr.bf16.mxu0 0
            %1144 = vmatmul.mubr.bf16.gmra.mxu0 %v998
            %v1145 = vpop.f32.mrf.mxu0
            %v1146 = vadd.f32 0.0, %v1145
            %v1147 = vpop.f32.mrf.mxu0
            %v1148 = vpop.f32.mrf.mxu0
            %v1149 = vadd.f32 0.0, %v1148
            %v1150 = vpop.f32.mrf.mxu0
            %1151 = vdwg.mxu0
            %v1152 = vpack.c.bf16 %v1093, %v1090
            %v1153 = vpack.c.bf16 %v1101, %v1098
            %v1154 = vpack.c.bf16 %v1109, %v1106
            %v1155 = vpack.c.bf16 %v1117, %v1114
            %v1156 = vpack.c.bf16 %v1125, %v1122
            %v1157 = vpack.c.bf16 %v1133, %v1130
            %v1158 = vpack.c.bf16 %v1141, %v1138
            %v1159 = vpack.c.bf16 %v1149, %v1146
            %v1168 = vunpack.c.l.b16 %v1152
            %v1169 = vunpack.c.h.b16 %v1152
            %v1170 = vunpack.c.l.b16 %v1153
            %v1171 = vunpack.c.h.b16 %v1153
            %v1172 = vunpack.c.l.b16 %v1154
            %v1173 = vunpack.c.h.b16 %v1154
            %v1174 = vunpack.c.l.b16 %v1155
            %v1175 = vunpack.c.h.b16 %v1155
            %v1176 = vunpack.c.l.b16 %v1156
            %v1177 = vunpack.c.h.b16 %v1156
            %v1178 = vunpack.c.l.b16 %v1157
            %v1179 = vunpack.c.h.b16 %v1157
            %v1180 = vunpack.c.l.b16 %v1158
            %v1181 = vunpack.c.h.b16 %v1158
            %v1182 = vunpack.c.l.b16 %v1159
            %v1183 = vunpack.c.h.b16 %v1159
            %v1184 = vpack.c.b16 %v1168, %v1168
            %v1185 = vpack.c.b16 %v1169, %v1169
            %v1186 = vpack.c.b16 %v1170, %v1170
            %v1187 = vpack.c.b16 %v1171, %v1171
            %v1188 = vpack.c.b16 %v1172, %v1172
            %v1189 = vpack.c.b16 %v1173, %v1173
            %v1190 = vpack.c.b16 %v1174, %v1174
            %v1191 = vpack.c.b16 %v1175, %v1175
            %v1192 = vpack.c.b16 %v1176, %v1176
            %v1193 = vpack.c.b16 %v1177, %v1177
            %v1194 = vpack.c.b16 %v1178, %v1178
            %v1195 = vpack.c.b16 %v1179, %v1179
            %v1196 = vpack.c.b16 %v1180, %v1180
            %v1197 = vpack.c.b16 %v1181, %v1181
            %v1198 = vpack.c.b16 %v1182, %v1182
            %v1199 = vpack.c.b16 %v1183, %v1183
            %1216 = vst [vmem:[#allocation3] sm:$0xf] %v1184
            %1217 = vst [vmem:[#allocation3 + $0x4] sm:$0xf] %v1185
            %1218 = vst [vmem:[#allocation3 + $0x8] sm:$0xf] %v1186
            %1219 = vst [vmem:[#allocation3 + $0xc] sm:$0xf] %v1187
            %1220 = vst [vmem:[#allocation3 + $0x10] sm:$0xf] %v1188
            %1221 = vst [vmem:[#allocation3 + $0x14] sm:$0xf] %v1189
            %1222 = vst [vmem:[#allocation3 + $0x18] sm:$0xf] %v1190
            %1223 = vst [vmem:[#allocation3 + $0x1c] sm:$0xf] %v1191
            %1224 = vst [vmem:[#allocation3 + $0x20] sm:$0xf] %v1192
            %1225 = vst [vmem:[#allocation3 + $0x24] sm:$0xf] %v1193
            %1226 = vst [vmem:[#allocation3 + $0x28] sm:$0xf] %v1194
            %1227 = vst [vmem:[#allocation3 + $0x2c] sm:$0xf] %v1195
            %1228 = vst [vmem:[#allocation3 + $0x30] sm:$0xf] %v1196
            %1229 = vst [vmem:[#allocation3 + $0x34] sm:$0xf] %v1197
            %1230 = vst [vmem:[#allocation3 + $0x38] sm:$0xf] %v1198
            %1231 = vst [vmem:[#allocation3 + $0x3c] sm:$0xf] %v1199
          $region64: #{tpu_custom_call.1} parent=59 // pred_fallthru
            _
          %v1232 = vld [vmem:[#allocation3] sm:$0xf]
          %v1233 = vld [vmem:[#allocation3 + $0x4] sm:$0xf]
          %v1234 = vld [vmem:[#allocation3 + $0x8] sm:$0xf]
          %v1235 = vld [vmem:[#allocation3 + $0xc] sm:$0xf]
          %v1236 = vld [vmem:[#allocation3 + $0x10] sm:$0xf]
          %v1237 = vld [vmem:[#allocation3 + $0x14] sm:$0xf]
          %v1238 = vld [vmem:[#allocation3 + $0x18] sm:$0xf]
          %v1239 = vld [vmem:[#allocation3 + $0x1c] sm:$0xf]
          %v1240 = vld [vmem:[#allocation3 + $0x20] sm:$0xf]
          %v1241 = vld [vmem:[#allocation3 + $0x24] sm:$0xf]
          %v1242 = vld [vmem:[#allocation3 + $0x28] sm:$0xf]
          %v1243 = vld [vmem:[#allocation3 + $0x2c] sm:$0xf]
          %v1244 = vld [vmem:[#allocation3 + $0x30] sm:$0xf]
          %v1245 = vld [vmem:[#allocation3 + $0x34] sm:$0xf]
          %v1246 = vld [vmem:[#allocation3 + $0x38] sm:$0xf]
          %v1247 = vld [vmem:[#allocation3 + $0x3c] sm:$0xf]
          %v1248 = vld [vmem:[%s270] sm:$0x1]
          %v1250 = vlaneseq
          %v1251 = vshrl.u32 %v1250, 7
          %v1252 = vsub.s32 0, %v1251
          %v1253 = vrot.slane %v1248, %v1252
          %v1271 = vunpack.c.l.b16 %v274
          %v1272 = vunpack.c.l.b16 %v275
          %v1273 = vunpack.c.l.b16 %v276
          %v1274 = vunpack.c.l.b16 %v277
          %v1275 = vunpack.c.l.b16 %v278
          %v1276 = vunpack.c.l.b16 %v279
          %v1277 = vunpack.c.l.b16 %v280
          %v1278 = vunpack.c.l.b16 %v281
          %v1279 = vunpack.c.l.b16 %v282
          %v1280 = vunpack.c.l.b16 %v283
          %v1281 = vunpack.c.l.b16 %v284
          %v1282 = vunpack.c.l.b16 %v285
          %v1283 = vunpack.c.l.b16 %v286
          %v1284 = vunpack.c.l.b16 %v287
          %v1285 = vunpack.c.l.b16 %v288
          %v1286 = vunpack.c.l.b16 %v289
          %v1287 = vpack.c.b16 %v1272, %v1271
          %v1288 = vpack.c.b16 %v1274, %v1273
          %v1289 = vpack.c.b16 %v1276, %v1275
          %v1290 = vpack.c.b16 %v1278, %v1277
          %v1291 = vpack.c.b16 %v1280, %v1279
          %v1292 = vpack.c.b16 %v1282, %v1281
          %v1293 = vpack.c.b16 %v1284, %v1283
          %v1294 = vpack.c.b16 %v1286, %v1285
          %v1319 = vunpack.c.l.b16 %v1232
          %v1320 = vunpack.c.l.b16 %v1233
          %v1321 = vunpack.c.l.b16 %v1234
          %v1322 = vunpack.c.l.b16 %v1235
          %v1323 = vunpack.c.l.b16 %v1236
          %v1324 = vunpack.c.l.b16 %v1237
          %v1325 = vunpack.c.l.b16 %v1238
          %v1326 = vunpack.c.l.b16 %v1239
          %v1327 = vunpack.c.l.b16 %v1240
          %v1328 = vunpack.c.l.b16 %v1241
          %v1329 = vunpack.c.l.b16 %v1242
          %v1330 = vunpack.c.l.b16 %v1243
          %v1331 = vunpack.c.l.b16 %v1244
          %v1332 = vunpack.c.l.b16 %v1245
          %v1333 = vunpack.c.l.b16 %v1246
          %v1334 = vunpack.c.l.b16 %v1247
          %v1335 = vpack.c.b16 %v1320, %v1319
          %v1336 = vpack.c.b16 %v1322, %v1321
          %v1337 = vpack.c.b16 %v1324, %v1323
          %v1338 = vpack.c.b16 %v1326, %v1325
          %v1339 = vpack.c.b16 %v1328, %v1327
          %v1340 = vpack.c.b16 %v1330, %v1329
          %v1341 = vpack.c.b16 %v1332, %v1331
          %v1342 = vpack.c.b16 %v1334, %v1333
          %1351 = vmatprep.subr.bf16.mxu0 0
          %1352 = vmatpush1.bf16.msra.mxu0 %v1342
          %1353 = vmatprep.subr.bf16.mxu0 0
          %1354 = vmatpush1.bf16.msra.mxu0 %v1341
          %1355 = vmatprep.subr.bf16.mxu0 0
          %1356 = vmatpush1.bf16.msra.mxu0 %v1340
          %1357 = vmatprep.subr.bf16.mxu0 0
          %1358 = vmatpush1.bf16.msra.mxu0 %v1339
          %1359 = vmatprep.subr.bf16.mxu0 0
          %1360 = vmatpush1.bf16.msra.mxu0 %v1338
          %1361 = vmatprep.subr.bf16.mxu0 0
          %1362 = vmatpush1.bf16.msra.mxu0 %v1337
          %1363 = vmatprep.subr.bf16.mxu0 0
          %1364 = vmatpush1.bf16.msra.mxu0 %v1336
          %1365 = vmatprep.subr.bf16.mxu0 0
          %1366 = vmatpush1.bf16.msra.mxu0 %v1335
          %1367 = vmatprep.subr.bf16.mxu0 0
          %1368 = vmatpush2.bf16.msra.mxu0 0
          %1369 = vmatprep.subr.bf16.mxu0 0
          %1370 = vmatpush2.bf16.msra.mxu0 0
          %1371 = vmatprep.subr.bf16.mxu0 0
          %1372 = vmatpush2.bf16.msra.mxu0 0
          %1373 = vmatprep.subr.bf16.mxu0 0
          %1374 = vmatpush2.bf16.msra.mxu0 0
          %1375 = vmatprep.subr.bf16.mxu0 0
          %1376 = vmatpush2.bf16.msra.mxu0 0
          %1377 = vmatprep.subr.bf16.mxu0 0
          %1378 = vmatpush2.bf16.msra.mxu0 0
          %1379 = vmatprep.subr.bf16.mxu0 0
          %1380 = vmatpush2.bf16.msra.mxu0 0
          %1381 = vmatprep.subr.bf16.mxu0 0
          %1382 = vmatpush2.bf16.msra.mxu0 0
          %1383 = vmatprep.mubr.bf16.mxu0 0
          %1384 = vmatmul.mubr.bf16.gmra.mxu0 %v1287
          %v1385 = vpop.f32.mrf.mxu0
          %v1386 = vadd.f32 %v1253, %v1385
          %v1387 = vpop.f32.mrf.mxu0
          %v1388 = vpop.f32.mrf.mxu0
          %v1389 = vadd.f32 %v1253, %v1388
          %v1390 = vpop.f32.mrf.mxu0
          %1391 = vmatprep.mubr.bf16.mxu0 0
          %1392 = vmatmul.mubr.bf16.gmra.mxu0 %v1288
          %v1393 = vpop.f32.mrf.mxu0
          %v1394 = vadd.f32 %v1253, %v1393
          %v1395 = vpop.f32.mrf.mxu0
          %v1396 = vpop.f32.mrf.mxu0
          %v1397 = vadd.f32 %v1253, %v1396
          %v1398 = vpop.f32.mrf.mxu0
          %1399 = vmatprep.mubr.bf16.mxu0 0
          %1400 = vmatmul.mubr.bf16.gmra.mxu0 %v1289
          %v1401 = vpop.f32.mrf.mxu0
          %v1402 = vadd.f32 %v1253, %v1401
          %v1403 = vpop.f32.mrf.mxu0
          %v1404 = vpop.f32.mrf.mxu0
          %v1405 = vadd.f32 %v1253, %v1404
          %v1406 = vpop.f32.mrf.mxu0
          %1407 = vmatprep.mubr.bf16.mxu0 0
          %1408 = vmatmul.mubr.bf16.gmra.mxu0 %v1290
          %v1409 = vpop.f32.mrf.mxu0
          %v1410 = vadd.f32 %v1253, %v1409
          %v1411 = vpop.f32.mrf.mxu0
          %v1412 = vpop.f32.mrf.mxu0
          %v1413 = vadd.f32 %v1253, %v1412
          %v1414 = vpop.f32.mrf.mxu0
          %1415 = vmatprep.mubr.bf16.mxu0 0
          %1416 = vmatmul.mubr.bf16.gmra.mxu0 %v1291
          %v1417 = vpop.f32.mrf.mxu0
          %v1418 = vadd.f32 %v1253, %v1417
          %v1419 = vpop.f32.mrf.mxu0
          %v1420 = vpop.f32.mrf.mxu0
          %v1421 = vadd.f32 %v1253, %v1420
          %v1422 = vpop.f32.mrf.mxu0
          %1423 = vmatprep.mubr.bf16.mxu0 0
          %1424 = vmatmul.mubr.bf16.gmra.mxu0 %v1292
          %v1425 = vpop.f32.mrf.mxu0
          %v1426 = vadd.f32 %v1253, %v1425
          %v1427 = vpop.f32.mrf.mxu0
          %v1428 = vpop.f32.mrf.mxu0
          %v1429 = vadd.f32 %v1253, %v1428
          %v1430 = vpop.f32.mrf.mxu0
          %1431 = vmatprep.mubr.bf16.mxu0 0
          %1432 = vmatmul.mubr.bf16.gmra.mxu0 %v1293
          %v1433 = vpop.f32.mrf.mxu0
          %v1434 = vadd.f32 %v1253, %v1433
          %v1435 = vpop.f32.mrf.mxu0
          %v1436 = vpop.f32.mrf.mxu0
          %v1437 = vadd.f32 %v1253, %v1436
          %v1438 = vpop.f32.mrf.mxu0
          %1439 = vmatprep.mubr.bf16.mxu0 0
          %1440 = vmatmul.mubr.bf16.gmra.mxu0 %v1294
          %v1441 = vpop.f32.mrf.mxu0
          %v1442 = vadd.f32 %v1253, %v1441
          %v1443 = vpop.f32.mrf.mxu0
          %v1444 = vpop.f32.mrf.mxu0
          %v1445 = vadd.f32 %v1253, %v1444
          %v1446 = vpop.f32.mrf.mxu0
          %1447 = vdwg.mxu0
          %v1448 = vmax.f32 %v1386, 0.0
          %v1449 = vmax.f32 %v1389, 0.0
          %v1450 = vmax.f32 %v1394, 0.0
          %v1451 = vmax.f32 %v1397, 0.0
          %v1452 = vmax.f32 %v1402, 0.0
          %v1453 = vmax.f32 %v1405, 0.0
          %v1454 = vmax.f32 %v1410, 0.0
          %v1455 = vmax.f32 %v1413, 0.0
          %v1456 = vmax.f32 %v1418, 0.0
          %v1457 = vmax.f32 %v1421, 0.0
          %v1458 = vmax.f32 %v1426, 0.0
          %v1459 = vmax.f32 %v1429, 0.0
          %v1460 = vmax.f32 %v1434, 0.0
          %v1461 = vmax.f32 %v1437, 0.0
          %v1462 = vmax.f32 %v1442, 0.0
          %v1463 = vmax.f32 %v1445, 0.0
          %v1464 = vpack.c.bf16 %v1449, %v1448
          %v1465 = vpack.c.bf16 %v1451, %v1450
          %v1466 = vpack.c.bf16 %v1453, %v1452
          %v1467 = vpack.c.bf16 %v1455, %v1454
          %v1468 = vpack.c.bf16 %v1457, %v1456
          %v1469 = vpack.c.bf16 %v1459, %v1458
          %v1470 = vpack.c.bf16 %v1461, %v1460
          %v1471 = vpack.c.bf16 %v1463, %v1462
          %v1480 = vunpack.c.l.b16 %v1464
          %v1481 = vunpack.c.h.b16 %v1464
          %v1482 = vunpack.c.l.b16 %v1465
          %v1483 = vunpack.c.h.b16 %v1465
          %v1484 = vunpack.c.l.b16 %v1466
          %v1485 = vunpack.c.h.b16 %v1466
          %v1486 = vunpack.c.l.b16 %v1467
          %v1487 = vunpack.c.h.b16 %v1467
          %v1488 = vunpack.c.l.b16 %v1468
          %v1489 = vunpack.c.h.b16 %v1468
          %v1490 = vunpack.c.l.b16 %v1469
          %v1491 = vunpack.c.h.b16 %v1469
          %v1492 = vunpack.c.l.b16 %v1470
          %v1493 = vunpack.c.h.b16 %v1470
          %v1494 = vunpack.c.l.b16 %v1471
          %v1495 = vunpack.c.h.b16 %v1471
          %v1496 = vpack.c.b16 %v1480, %v1480
          %v1497 = vpack.c.b16 %v1481, %v1481
          %v1498 = vpack.c.b16 %v1482, %v1482
          %v1499 = vpack.c.b16 %v1483, %v1483
          %v1500 = vpack.c.b16 %v1484, %v1484
          %v1501 = vpack.c.b16 %v1485, %v1485
          %v1502 = vpack.c.b16 %v1486, %v1486
          %v1503 = vpack.c.b16 %v1487, %v1487
          %v1504 = vpack.c.b16 %v1488, %v1488
          %v1505 = vpack.c.b16 %v1489, %v1489
          %v1506 = vpack.c.b16 %v1490, %v1490
          %v1507 = vpack.c.b16 %v1491, %v1491
          %v1508 = vpack.c.b16 %v1492, %v1492
          %v1509 = vpack.c.b16 %v1493, %v1493
          %v1510 = vpack.c.b16 %v1494, %v1494
          %v1511 = vpack.c.b16 %v1495, %v1495
          %s1528 = sshra.s32 %s273, 3
          %s1529 = sand.u32 %s273, 7
          %s1530 = smul.addr %s1528, 4
          %s1531 = scalar_lea.vmem [#allocation2], %s1530
          %1532 = vst [vmem:[%s1531] sm:$0xf] %v1496
          %1533 = vst [vmem:[%s1531 + $0x4] sm:$0xf] %v1497
          %1534 = vst [vmem:[%s1531 + $0x8] sm:$0xf] %v1498
          %1535 = vst [vmem:[%s1531 + $0xc] sm:$0xf] %v1499
          %1536 = vst [vmem:[%s1531 + $0x10] sm:$0xf] %v1500
          %1537 = vst [vmem:[%s1531 + $0x14] sm:$0xf] %v1501
          %1538 = vst [vmem:[%s1531 + $0x18] sm:$0xf] %v1502
          %1539 = vst [vmem:[%s1531 + $0x1c] sm:$0xf] %v1503
          %1540 = vst [vmem:[%s1531 + $0x20] sm:$0xf] %v1504
          %1541 = vst [vmem:[%s1531 + $0x24] sm:$0xf] %v1505
          %1542 = vst [vmem:[%s1531 + $0x28] sm:$0xf] %v1506
          %1543 = vst [vmem:[%s1531 + $0x2c] sm:$0xf] %v1507
          %1544 = vst [vmem:[%s1531 + $0x30] sm:$0xf] %v1508
          %1545 = vst [vmem:[%s1531 + $0x34] sm:$0xf] %v1509
          %1546 = vst [vmem:[%s1531 + $0x38] sm:$0xf] %v1510
          %1547 = vst [vmem:[%s1531 + $0x3c] sm:$0xf] %v1511
        $region60: #{tpu_custom_call.1} parent=35 // pred_fallthru
          _
        %p1548 = scmp.eq.s32.totalorder %s22, 2
        // Predicated region
        $region65: #{tpu_custom_call.1} parent=35 // pred_check
          %p1549 = pneg %p1548
        $region66: #{tpu_custom_call.1} parent=35 // pred_check_branch
          %1551 = sbr.rel (%p1549) target = $region68
        $region67: #{tpu_custom_call.1} parent=35 // pred_region
          %p1552 = scmp.eq.s32.totalorder %s23, 0
          // Predicated region
          $region69: #{tpu_custom_call.1} parent=67 // pred_check
            %p1553 = pneg %p1552
          $region70: #{tpu_custom_call.1} parent=67 // pred_check_branch
            %1555 = sbr.rel (%p1553) target = $region72
          $region71: #{tpu_custom_call.1} parent=67 // pred_region
            %v1556 = vld [vmem:[#allocation2] sm:$0xf]
            %v1557 = vld [vmem:[#allocation2 + $0x4] sm:$0xf]
            %v1558 = vld [vmem:[#allocation2 + $0x8] sm:$0xf]
            %v1559 = vld [vmem:[#allocation2 + $0xc] sm:$0xf]
            %v1560 = vld [vmem:[#allocation2 + $0x10] sm:$0xf]
            %v1561 = vld [vmem:[#allocation2 + $0x14] sm:$0xf]
            %v1562 = vld [vmem:[#allocation2 + $0x18] sm:$0xf]
            %v1563 = vld [vmem:[#allocation2 + $0x1c] sm:$0xf]
            %v1564 = vld [vmem:[#allocation2 + $0x20] sm:$0xf]
            %v1565 = vld [vmem:[#allocation2 + $0x24] sm:$0xf]
            %v1566 = vld [vmem:[#allocation2 + $0x28] sm:$0xf]
            %v1567 = vld [vmem:[#allocation2 + $0x2c] sm:$0xf]
            %v1568 = vld [vmem:[#allocation2 + $0x30] sm:$0xf]
            %v1569 = vld [vmem:[#allocation2 + $0x34] sm:$0xf]
            %v1570 = vld [vmem:[#allocation2 + $0x38] sm:$0xf]
            %v1571 = vld [vmem:[#allocation2 + $0x3c] sm:$0xf]
            %v1572 = vld [vmem:[%s244] sm:$0xf]
            %v1573 = vld [vmem:[%s244 + $0x4] sm:$0xf]
            %v1574 = vld [vmem:[%s244 + $0x8] sm:$0xf]
            %v1575 = vld [vmem:[%s244 + $0xc] sm:$0xf]
            %v1576 = vld [vmem:[%s244 + $0x10] sm:$0xf]
            %v1577 = vld [vmem:[%s244 + $0x14] sm:$0xf]
            %v1578 = vld [vmem:[%s244 + $0x18] sm:$0xf]
            %v1579 = vld [vmem:[%s244 + $0x1c] sm:$0xf]
            %v1580 = vld [vmem:[%s244 + $0x20] sm:$0xf]
            %v1581 = vld [vmem:[%s244 + $0x24] sm:$0xf]
            %v1582 = vld [vmem:[%s244 + $0x28] sm:$0xf]
            %v1583 = vld [vmem:[%s244 + $0x2c] sm:$0xf]
            %v1584 = vld [vmem:[%s244 + $0x30] sm:$0xf]
            %v1585 = vld [vmem:[%s244 + $0x34] sm:$0xf]
            %v1586 = vld [vmem:[%s244 + $0x38] sm:$0xf]
            %v1587 = vld [vmem:[%s244 + $0x3c] sm:$0xf]
            %v1604 = vunpack.c.l.b16 %v1556
            %v1605 = vunpack.c.l.b16 %v1557
            %v1606 = vunpack.c.l.b16 %v1558
            %v1607 = vunpack.c.l.b16 %v1559
            %v1608 = vunpack.c.l.b16 %v1560
            %v1609 = vunpack.c.l.b16 %v1561
            %v1610 = vunpack.c.l.b16 %v1562
            %v1611 = vunpack.c.l.b16 %v1563
            %v1612 = vunpack.c.l.b16 %v1564
            %v1613 = vunpack.c.l.b16 %v1565
            %v1614 = vunpack.c.l.b16 %v1566
            %v1615 = vunpack.c.l.b16 %v1567
            %v1616 = vunpack.c.l.b16 %v1568
            %v1617 = vunpack.c.l.b16 %v1569
            %v1618 = vunpack.c.l.b16 %v1570
            %v1619 = vunpack.c.l.b16 %v1571
            %v1620 = vpack.c.b16 %v1605, %v1604
            %v1621 = vpack.c.b16 %v1607, %v1606
            %v1622 = vpack.c.b16 %v1609, %v1608
            %v1623 = vpack.c.b16 %v1611, %v1610
            %v1624 = vpack.c.b16 %v1613, %v1612
            %v1625 = vpack.c.b16 %v1615, %v1614
            %v1626 = vpack.c.b16 %v1617, %v1616
            %v1627 = vpack.c.b16 %v1619, %v1618
            %v1652 = vunpack.c.l.b16 %v1572
            %v1653 = vunpack.c.l.b16 %v1573
            %v1654 = vunpack.c.l.b16 %v1574
            %v1655 = vunpack.c.l.b16 %v1575
            %v1656 = vunpack.c.l.b16 %v1576
            %v1657 = vunpack.c.l.b16 %v1577
            %v1658 = vunpack.c.l.b16 %v1578
            %v1659 = vunpack.c.l.b16 %v1579
            %v1660 = vunpack.c.l.b16 %v1580
            %v1661 = vunpack.c.l.b16 %v1581
            %v1662 = vunpack.c.l.b16 %v1582
            %v1663 = vunpack.c.l.b16 %v1583
            %v1664 = vunpack.c.l.b16 %v1584
            %v1665 = vunpack.c.l.b16 %v1585
            %v1666 = vunpack.c.l.b16 %v1586
            %v1667 = vunpack.c.l.b16 %v1587
            %v1668 = vpack.c.b16 %v1653, %v1652
            %v1669 = vpack.c.b16 %v1655, %v1654
            %v1670 = vpack.c.b16 %v1657, %v1656
            %v1671 = vpack.c.b16 %v1659, %v1658
            %v1672 = vpack.c.b16 %v1661, %v1660
            %v1673 = vpack.c.b16 %v1663, %v1662
            %v1674 = vpack.c.b16 %v1665, %v1664
            %v1675 = vpack.c.b16 %v1667, %v1666
            %1684 = vmatprep.subr.bf16.mxu0 0
            %1685 = vmatpush1.bf16.msra.mxu0 %v1675
            %1686 = vmatprep.subr.bf16.mxu0 0
            %1687 = vmatpush1.bf16.msra.mxu0 %v1674
            %1688 = vmatprep.subr.bf16.mxu0 0
            %1689 = vmatpush1.bf16.msra.mxu0 %v1673
            %1690 = vmatprep.subr.bf16.mxu0 0
            %1691 = vmatpush1.bf16.msra.mxu0 %v1672
            %1692 = vmatprep.subr.bf16.mxu0 0
            %1693 = vmatpush1.bf16.msra.mxu0 %v1671
            %1694 = vmatprep.subr.bf16.mxu0 0
            %1695 = vmatpush1.bf16.msra.mxu0 %v1670
            %1696 = vmatprep.subr.bf16.mxu0 0
            %1697 = vmatpush1.bf16.msra.mxu0 %v1669
            %1698 = vmatprep.subr.bf16.mxu0 0
            %1699 = vmatpush1.bf16.msra.mxu0 %v1668
            %1700 = vmatprep.subr.bf16.mxu0 0
            %1701 = vmatpush2.bf16.msra.mxu0 0
            %1702 = vmatprep.subr.bf16.mxu0 0
            %1703 = vmatpush2.bf16.msra.mxu0 0
            %1704 = vmatprep.subr.bf16.mxu0 0
            %1705 = vmatpush2.bf16.msra.mxu0 0
            %1706 = vmatprep.subr.bf16.mxu0 0
            %1707 = vmatpush2.bf16.msra.mxu0 0
            %1708 = vmatprep.subr.bf16.mxu0 0
            %1709 = vmatpush2.bf16.msra.mxu0 0
            %1710 = vmatprep.subr.bf16.mxu0 0
            %1711 = vmatpush2.bf16.msra.mxu0 0
            %1712 = vmatprep.subr.bf16.mxu0 0
            %1713 = vmatpush2.bf16.msra.mxu0 0
            %1714 = vmatprep.subr.bf16.mxu0 0
            %1715 = vmatpush2.bf16.msra.mxu0 0
            %1716 = vmatprep.mubr.bf16.mxu0 0
            %1717 = vmatmul.mubr.bf16.gmra.mxu0 %v1620
            %v1718 = vpop.f32.mrf.mxu0
            %v1719 = vadd.f32 0.0, %v1718
            %v1720 = vpop.f32.mrf.mxu0
            %v1721 = vpop.f32.mrf.mxu0
            %v1722 = vadd.f32 0.0, %v1721
            %v1723 = vpop.f32.mrf.mxu0
            %1724 = vmatprep.mubr.bf16.mxu0 0
            %1725 = vmatmul.mubr.bf16.gmra.mxu0 %v1621
            %v1726 = vpop.f32.mrf.mxu0
            %v1727 = vadd.f32 0.0, %v1726
            %v1728 = vpop.f32.mrf.mxu0
            %v1729 = vpop.f32.mrf.mxu0
            %v1730 = vadd.f32 0.0, %v1729
            %v1731 = vpop.f32.mrf.mxu0
            %1732 = vmatprep.mubr.bf16.mxu0 0
            %1733 = vmatmul.mubr.bf16.gmra.mxu0 %v1622
            %v1734 = vpop.f32.mrf.mxu0
            %v1735 = vadd.f32 0.0, %v1734
            %v1736 = vpop.f32.mrf.mxu0
            %v1737 = vpop.f32.mrf.mxu0
            %v1738 = vadd.f32 0.0, %v1737
            %v1739 = vpop.f32.mrf.mxu0
            %1740 = vmatprep.mubr.bf16.mxu0 0
            %1741 = vmatmul.mubr.bf16.gmra.mxu0 %v1623
            %v1742 = vpop.f32.mrf.mxu0
            %v1743 = vadd.f32 0.0, %v1742
            %v1744 = vpop.f32.mrf.mxu0
            %v1745 = vpop.f32.mrf.mxu0
            %v1746 = vadd.f32 0.0, %v1745
            %v1747 = vpop.f32.mrf.mxu0
            %1748 = vmatprep.mubr.bf16.mxu0 0
            %1749 = vmatmul.mubr.bf16.gmra.mxu0 %v1624
            %v1750 = vpop.f32.mrf.mxu0
            %v1751 = vadd.f32 0.0, %v1750
            %v1752 = vpop.f32.mrf.mxu0
            %v1753 = vpop.f32.mrf.mxu0
            %v1754 = vadd.f32 0.0, %v1753
            %v1755 = vpop.f32.mrf.mxu0
            %1756 = vmatprep.mubr.bf16.mxu0 0
            %1757 = vmatmul.mubr.bf16.gmra.mxu0 %v1625
            %v1758 = vpop.f32.mrf.mxu0
            %v1759 = vadd.f32 0.0, %v1758
            %v1760 = vpop.f32.mrf.mxu0
            %v1761 = vpop.f32.mrf.mxu0
            %v1762 = vadd.f32 0.0, %v1761
            %v1763 = vpop.f32.mrf.mxu0
            %1764 = vmatprep.mubr.bf16.mxu0 0
            %1765 = vmatmul.mubr.bf16.gmra.mxu0 %v1626
            %v1766 = vpop.f32.mrf.mxu0
            %v1767 = vadd.f32 0.0, %v1766
            %v1768 = vpop.f32.mrf.mxu0
            %v1769 = vpop.f32.mrf.mxu0
            %v1770 = vadd.f32 0.0, %v1769
            %v1771 = vpop.f32.mrf.mxu0
            %1772 = vmatprep.mubr.bf16.mxu0 0
            %1773 = vmatmul.mubr.bf16.gmra.mxu0 %v1627
            %v1774 = vpop.f32.mrf.mxu0
            %v1775 = vadd.f32 0.0, %v1774
            %v1776 = vpop.f32.mrf.mxu0
            %v1777 = vpop.f32.mrf.mxu0
            %v1778 = vadd.f32 0.0, %v1777
            %v1779 = vpop.f32.mrf.mxu0
            %1780 = vdwg.mxu0
            %v1781 = vpack.c.bf16 %v1722, %v1719
            %v1782 = vpack.c.bf16 %v1730, %v1727
            %v1783 = vpack.c.bf16 %v1738, %v1735
            %v1784 = vpack.c.bf16 %v1746, %v1743
            %v1785 = vpack.c.bf16 %v1754, %v1751
            %v1786 = vpack.c.bf16 %v1762, %v1759
            %v1787 = vpack.c.bf16 %v1770, %v1767
            %v1788 = vpack.c.bf16 %v1778, %v1775
            %v1797 = vunpack.c.l.b16 %v1781
            %v1798 = vunpack.c.h.b16 %v1781
            %v1799 = vunpack.c.l.b16 %v1782
            %v1800 = vunpack.c.h.b16 %v1782
            %v1801 = vunpack.c.l.b16 %v1783
            %v1802 = vunpack.c.h.b16 %v1783
            %v1803 = vunpack.c.l.b16 %v1784
            %v1804 = vunpack.c.h.b16 %v1784
            %v1805 = vunpack.c.l.b16 %v1785
            %v1806 = vunpack.c.h.b16 %v1785
            %v1807 = vunpack.c.l.b16 %v1786
            %v1808 = vunpack.c.h.b16 %v1786
            %v1809 = vunpack.c.l.b16 %v1787
            %v1810 = vunpack.c.h.b16 %v1787
            %v1811 = vunpack.c.l.b16 %v1788
            %v1812 = vunpack.c.h.b16 %v1788
            %v1813 = vpack.c.b16 %v1797, %v1797
            %v1814 = vpack.c.b16 %v1798, %v1798
            %v1815 = vpack.c.b16 %v1799, %v1799
            %v1816 = vpack.c.b16 %v1800, %v1800
            %v1817 = vpack.c.b16 %v1801, %v1801
            %v1818 = vpack.c.b16 %v1802, %v1802
            %v1819 = vpack.c.b16 %v1803, %v1803
            %v1820 = vpack.c.b16 %v1804, %v1804
            %v1821 = vpack.c.b16 %v1805, %v1805
            %v1822 = vpack.c.b16 %v1806, %v1806
            %v1823 = vpack.c.b16 %v1807, %v1807
            %v1824 = vpack.c.b16 %v1808, %v1808
            %v1825 = vpack.c.b16 %v1809, %v1809
            %v1826 = vpack.c.b16 %v1810, %v1810
            %v1827 = vpack.c.b16 %v1811, %v1811
            %v1828 = vpack.c.b16 %v1812, %v1812
            %1845 = vst [vmem:[#allocation3] sm:$0xf] %v1813
            %1846 = vst [vmem:[#allocation3 + $0x4] sm:$0xf] %v1814
            %1847 = vst [vmem:[#allocation3 + $0x8] sm:$0xf] %v1815
            %1848 = vst [vmem:[#allocation3 + $0xc] sm:$0xf] %v1816
            %1849 = vst [vmem:[#allocation3 + $0x10] sm:$0xf] %v1817
            %1850 = vst [vmem:[#allocation3 + $0x14] sm:$0xf] %v1818
            %1851 = vst [vmem:[#allocation3 + $0x18] sm:$0xf] %v1819
            %1852 = vst [vmem:[#allocation3 + $0x1c] sm:$0xf] %v1820
            %1853 = vst [vmem:[#allocation3 + $0x20] sm:$0xf] %v1821
            %1854 = vst [vmem:[#allocation3 + $0x24] sm:$0xf] %v1822
            %1855 = vst [vmem:[#allocation3 + $0x28] sm:$0xf] %v1823
            %1856 = vst [vmem:[#allocation3 + $0x2c] sm:$0xf] %v1824
            %1857 = vst [vmem:[#allocation3 + $0x30] sm:$0xf] %v1825
            %1858 = vst [vmem:[#allocation3 + $0x34] sm:$0xf] %v1826
            %1859 = vst [vmem:[#allocation3 + $0x38] sm:$0xf] %v1827
            %1860 = vst [vmem:[#allocation3 + $0x3c] sm:$0xf] %v1828
          $region72: #{tpu_custom_call.1} parent=67 // pred_fallthru
            _
          %v1861 = vld [vmem:[#allocation3] sm:$0xf]
          %v1862 = vld [vmem:[#allocation3 + $0x4] sm:$0xf]
          %v1863 = vld [vmem:[#allocation3 + $0x8] sm:$0xf]
          %v1864 = vld [vmem:[#allocation3 + $0xc] sm:$0xf]
          %v1865 = vld [vmem:[#allocation3 + $0x10] sm:$0xf]
          %v1866 = vld [vmem:[#allocation3 + $0x14] sm:$0xf]
          %v1867 = vld [vmem:[#allocation3 + $0x18] sm:$0xf]
          %v1868 = vld [vmem:[#allocation3 + $0x1c] sm:$0xf]
          %v1869 = vld [vmem:[#allocation3 + $0x20] sm:$0xf]
          %v1870 = vld [vmem:[#allocation3 + $0x24] sm:$0xf]
          %v1871 = vld [vmem:[#allocation3 + $0x28] sm:$0xf]
          %v1872 = vld [vmem:[#allocation3 + $0x2c] sm:$0xf]
          %v1873 = vld [vmem:[#allocation3 + $0x30] sm:$0xf]
          %v1874 = vld [vmem:[#allocation3 + $0x34] sm:$0xf]
          %v1875 = vld [vmem:[#allocation3 + $0x38] sm:$0xf]
          %v1876 = vld [vmem:[#allocation3 + $0x3c] sm:$0xf]
          %v1877 = vld [vmem:[%s270] sm:$0x1]
          %v1879 = vlaneseq
          %v1880 = vshrl.u32 %v1879, 7
          %v1881 = vsub.s32 0, %v1880
          %v1882 = vrot.slane %v1877, %v1881
          %v1900 = vunpack.c.l.b16 %v274
          %v1901 = vunpack.c.l.b16 %v275
          %v1902 = vunpack.c.l.b16 %v276
          %v1903 = vunpack.c.l.b16 %v277
          %v1904 = vunpack.c.l.b16 %v278
          %v1905 = vunpack.c.l.b16 %v279
          %v1906 = vunpack.c.l.b16 %v280
          %v1907 = vunpack.c.l.b16 %v281
          %v1908 = vunpack.c.l.b16 %v282
          %v1909 = vunpack.c.l.b16 %v283
          %v1910 = vunpack.c.l.b16 %v284
          %v1911 = vunpack.c.l.b16 %v285
          %v1912 = vunpack.c.l.b16 %v286
          %v1913 = vunpack.c.l.b16 %v287
          %v1914 = vunpack.c.l.b16 %v288
          %v1915 = vunpack.c.l.b16 %v289
          %v1916 = vpack.c.b16 %v1901, %v1900
          %v1917 = vpack.c.b16 %v1903, %v1902
          %v1918 = vpack.c.b16 %v1905, %v1904
          %v1919 = vpack.c.b16 %v1907, %v1906
          %v1920 = vpack.c.b16 %v1909, %v1908
          %v1921 = vpack.c.b16 %v1911, %v1910
          %v1922 = vpack.c.b16 %v1913, %v1912
          %v1923 = vpack.c.b16 %v1915, %v1914
          %v1948 = vunpack.c.l.b16 %v1861
          %v1949 = vunpack.c.l.b16 %v1862
          %v1950 = vunpack.c.l.b16 %v1863
          %v1951 = vunpack.c.l.b16 %v1864
          %v1952 = vunpack.c.l.b16 %v1865
          %v1953 = vunpack.c.l.b16 %v1866
          %v1954 = vunpack.c.l.b16 %v1867
          %v1955 = vunpack.c.l.b16 %v1868
          %v1956 = vunpack.c.l.b16 %v1869
          %v1957 = vunpack.c.l.b16 %v1870
          %v1958 = vunpack.c.l.b16 %v1871
          %v1959 = vunpack.c.l.b16 %v1872
          %v1960 = vunpack.c.l.b16 %v1873
          %v1961 = vunpack.c.l.b16 %v1874
          %v1962 = vunpack.c.l.b16 %v1875
          %v1963 = vunpack.c.l.b16 %v1876
          %v1964 = vpack.c.b16 %v1949, %v1948
          %v1965 = vpack.c.b16 %v1951, %v1950
          %v1966 = vpack.c.b16 %v1953, %v1952
          %v1967 = vpack.c.b16 %v1955, %v1954
          %v1968 = vpack.c.b16 %v1957, %v1956
          %v1969 = vpack.c.b16 %v1959, %v1958
          %v1970 = vpack.c.b16 %v1961, %v1960
          %v1971 = vpack.c.b16 %v1963, %v1962
          %1980 = vmatprep.subr.bf16.mxu0 0
          %1981 = vmatpush1.bf16.msra.mxu0 %v1971
          %1982 = vmatprep.subr.bf16.mxu0 0
          %1983 = vmatpush1.bf16.msra.mxu0 %v1970
          %1984 = vmatprep.subr.bf16.mxu0 0
          %1985 = vmatpush1.bf16.msra.mxu0 %v1969
          %1986 = vmatprep.subr.bf16.mxu0 0
          %1987 = vmatpush1.bf16.msra.mxu0 %v1968
          %1988 = vmatprep.subr.bf16.mxu0 0
          %1989 = vmatpush1.bf16.msra.mxu0 %v1967
          %1990 = vmatprep.subr.bf16.mxu0 0
          %1991 = vmatpush1.bf16.msra.mxu0 %v1966
          %1992 = vmatprep.subr.bf16.mxu0 0
          %1993 = vmatpush1.bf16.msra.mxu0 %v1965
          %1994 = vmatprep.subr.bf16.mxu0 0
          %1995 = vmatpush1.bf16.msra.mxu0 %v1964
          %1996 = vmatprep.subr.bf16.mxu0 0
          %1997 = vmatpush2.bf16.msra.mxu0 0
          %1998 = vmatprep.subr.bf16.mxu0 0
          %1999 = vmatpush2.bf16.msra.mxu0 0
          %2000 = vmatprep.subr.bf16.mxu0 0
          %2001 = vmatpush2.bf16.msra.mxu0 0
          %2002 = vmatprep.subr.bf16.mxu0 0
          %2003 = vmatpush2.bf16.msra.mxu0 0
          %2004 = vmatprep.subr.bf16.mxu0 0
          %2005 = vmatpush2.bf16.msra.mxu0 0
          %2006 = vmatprep.subr.bf16.mxu0 0
          %2007 = vmatpush2.bf16.msra.mxu0 0
          %2008 = vmatprep.subr.bf16.mxu0 0
          %2009 = vmatpush2.bf16.msra.mxu0 0
          %2010 = vmatprep.subr.bf16.mxu0 0
          %2011 = vmatpush2.bf16.msra.mxu0 0
          %2012 = vmatprep.mubr.bf16.mxu0 0
          %2013 = vmatmul.mubr.bf16.gmra.mxu0 %v1916
          %v2014 = vpop.f32.mrf.mxu0
          %v2015 = vadd.f32 %v1882, %v2014
          %v2016 = vpop.f32.mrf.mxu0
          %v2017 = vpop.f32.mrf.mxu0
          %v2018 = vadd.f32 %v1882, %v2017
          %v2019 = vpop.f32.mrf.mxu0
          %2020 = vmatprep.mubr.bf16.mxu0 0
          %2021 = vmatmul.mubr.bf16.gmra.mxu0 %v1917
          %v2022 = vpop.f32.mrf.mxu0
          %v2023 = vadd.f32 %v1882, %v2022
          %v2024 = vpop.f32.mrf.mxu0
          %v2025 = vpop.f32.mrf.mxu0
          %v2026 = vadd.f32 %v1882, %v2025
          %v2027 = vpop.f32.mrf.mxu0
          %2028 = vmatprep.mubr.bf16.mxu0 0
          %2029 = vmatmul.mubr.bf16.gmra.mxu0 %v1918
          %v2030 = vpop.f32.mrf.mxu0
          %v2031 = vadd.f32 %v1882, %v2030
          %v2032 = vpop.f32.mrf.mxu0
          %v2033 = vpop.f32.mrf.mxu0
          %v2034 = vadd.f32 %v1882, %v2033
          %v2035 = vpop.f32.mrf.mxu0
          %2036 = vmatprep.mubr.bf16.mxu0 0
          %2037 = vmatmul.mubr.bf16.gmra.mxu0 %v1919
          %v2038 = vpop.f32.mrf.mxu0
          %v2039 = vadd.f32 %v1882, %v2038
          %v2040 = vpop.f32.mrf.mxu0
          %v2041 = vpop.f32.mrf.mxu0
          %v2042 = vadd.f32 %v1882, %v2041
          %v2043 = vpop.f32.mrf.mxu0
          %2044 = vmatprep.mubr.bf16.mxu0 0
          %2045 = vmatmul.mubr.bf16.gmra.mxu0 %v1920
          %v2046 = vpop.f32.mrf.mxu0
          %v2047 = vadd.f32 %v1882, %v2046
          %v2048 = vpop.f32.mrf.mxu0
          %v2049 = vpop.f32.mrf.mxu0
          %v2050 = vadd.f32 %v1882, %v2049
          %v2051 = vpop.f32.mrf.mxu0
          %2052 = vmatprep.mubr.bf16.mxu0 0
          %2053 = vmatmul.mubr.bf16.gmra.mxu0 %v1921
          %v2054 = vpop.f32.mrf.mxu0
          %v2055 = vadd.f32 %v1882, %v2054
          %v2056 = vpop.f32.mrf.mxu0
          %v2057 = vpop.f32.mrf.mxu0
          %v2058 = vadd.f32 %v1882, %v2057
          %v2059 = vpop.f32.mrf.mxu0
          %2060 = vmatprep.mubr.bf16.mxu0 0
          %2061 = vmatmul.mubr.bf16.gmra.mxu0 %v1922
          %v2062 = vpop.f32.mrf.mxu0
          %v2063 = vadd.f32 %v1882, %v2062
          %v2064 = vpop.f32.mrf.mxu0
          %v2065 = vpop.f32.mrf.mxu0
          %v2066 = vadd.f32 %v1882, %v2065
          %v2067 = vpop.f32.mrf.mxu0
          %2068 = vmatprep.mubr.bf16.mxu0 0
          %2069 = vmatmul.mubr.bf16.gmra.mxu0 %v1923
          %v2070 = vpop.f32.mrf.mxu0
          %v2071 = vadd.f32 %v1882, %v2070
          %v2072 = vpop.f32.mrf.mxu0
          %v2073 = vpop.f32.mrf.mxu0
          %v2074 = vadd.f32 %v1882, %v2073
          %v2075 = vpop.f32.mrf.mxu0
          %2076 = vdwg.mxu0
          %2077 = vst [vmem:[#allocation10] sm:$0xff] %v2015
          %2078 = vst [vmem:[#allocation10 + $0x8] sm:$0xff] %v2018
          %2079 = vst [vmem:[#allocation10 + $0x10] sm:$0xff] %v2023
          %2080 = vst [vmem:[#allocation10 + $0x18] sm:$0xff] %v2026
          %2081 = vst [vmem:[#allocation10 + $0x20] sm:$0xff] %v2031
          %2082 = vst [vmem:[#allocation10 + $0x28] sm:$0xff] %v2034
          %2083 = vst [vmem:[#allocation10 + $0x30] sm:$0xff] %v2039
          %2084 = vst [vmem:[#allocation10 + $0x38] sm:$0xff] %v2042
          %2085 = vst [vmem:[#allocation10 + $0x40] sm:$0xff] %v2047
          %2086 = vst [vmem:[#allocation10 + $0x48] sm:$0xff] %v2050
          %2087 = vst [vmem:[#allocation10 + $0x50] sm:$0xff] %v2055
          %2088 = vst [vmem:[#allocation10 + $0x58] sm:$0xff] %v2058
          %2089 = vst [vmem:[#allocation10 + $0x60] sm:$0xff] %v2063
          %2090 = vst [vmem:[#allocation10 + $0x68] sm:$0xff] %v2066
          %2091 = vst [vmem:[#allocation10 + $0x70] sm:$0xff] %v2071
          %2092 = vst [vmem:[#allocation10 + $0x78] sm:$0xff] %v2074
        $region68: #{tpu_custom_call.1} parent=35 // pred_fallthru
          _
        // Predicated region
        $region73: #{tpu_custom_call.1} parent=35 // pred_check
          %p2093 = pneg %p147
        $region74: #{tpu_custom_call.1} parent=35 // pred_check_branch
          %2095 = sbr.rel (%p2093) target = $region76
        $region75: #{tpu_custom_call.1} parent=35 // pred_region
          %s2096 = smul.u32 16, %s23
          %s2098 = ssub.s32 2048, 2048
          %2099 = vsyncadd [#allocation6], %s2098
          %s2100 = smul.addr %s2096, 128
          %s2101 = scalar_lea.hbm %s4, %s2100
          %s2102 = sshll.u32 [#allocation10], 4
          %s2103 = int_to_ptr.vmem [resolvable:$true] %s2102
          %2108 = dma.vmem_to_hbm [thread:$0]  %s2103, 2048, %s2101, [#allocation6], 128, 128, 8
        $region76: #{tpu_custom_call.1} parent=35 // pred_fallthru
          _
        // Predicated region
        $region77: #{tpu_custom_call.1} parent=35 // pred_check
          %p2109 = pneg %p147
        $region78: #{tpu_custom_call.1} parent=35 // pred_check_branch
          %2111 = sbr.rel (%p2109) target = $region80
        $region79: #{tpu_custom_call.1} parent=35 // pred_region
          %2112 = dma.done [#allocation6], 2048
        $region80: #{tpu_custom_call.1} parent=35 // pred_fallthru
          _
      $region36: #{tpu_custom_call.1} parent=5 // pred_fallthru
        _
      %p2113 = scmp.le.s32.totalorder 2, %s13
      // Predicated region
      $region81: #{tpu_custom_call.1} parent=5 // pred_check
        %p2114 = pneg %p2113
      $region82: #{tpu_custom_call.1} parent=5 // pred_check_branch
        %2116 = sbr.rel (%p2114) target = $region84
      $region83: #{tpu_custom_call.1} parent=5 // pred_region
        %s2117 = ssub.s32 %s13, 2
      $region84: #{tpu_custom_call.1} parent=5 // pred_fallthru
        _
    $region6: #{tpu_custom_call.1} parent=1 // loop_footer
      %s17 = sadd.s32 1, %s13
    $region7: #{tpu_custom_call.1} parent=1 // loop_footer_branch
      %12 = sbr.rel target = $region3
    $region8: #{tpu_custom_call.1} parent=1 // loop_exit
      _
    %2118 = vsyncpa [#allocation5], 1
    %s2119 = scalar_lea.sflag [#allocation5], 1
    %2120 = vsyncpa %s2119, 1
    %2121 = vsyncpa [#allocation8], 1
    %2122 = vsyncpa [#allocation6], 1
    %s2123 = scalar_lea.sflag [#allocation6], 1
    %2124 = vsyncpa %s2123, 1

</llo_original>
